<compile_context>
chip_gen: v6e
topology: v6e:2x2x1
jax: 0.10.0
libtpu: 0.0.40
codegen_flags: <defaults>
</compile_context>

<pallas_src>
import functools

import numpy as np
import jax
import jax.numpy as jnp
from jax.experimental import pallas as pl
from jax.experimental.pallas import tpu as pltpu

NEG_SLOPE = 0.01   # nn.LeakyReLU default
BN_EPS = 1e-5      # nn.BatchNorm2d default


def _conv_lrelu_bn(src_ref, bw_ref, b_ref, g_ref, be_ref, s_ref, n, h, count):
    """3x3 conv (src pre-padded in H only; W padding folded into the banded
    weights) -> LeakyReLU -> training-mode BatchNorm.

    src_ref: (N, H+2, K) f32 padded slab, bw_ref: (3*K, WC) bf16 banded weight.
    Activations are lane-dense (N*H, WC) f32 throughout.
    """
    k = src_ref.shape[2]                 # W * C_in of this block
    wc = bw_ref.shape[1]                 # W * C_out

    # One K=3*W*Cin matmul: lane-concat the three H-shifted row slabs.
    lhs = jnp.concatenate(
        [src_ref[:, dy:dy + h, :].reshape(n * h, k) for dy in range(3)],
        axis=-1).astype(jnp.bfloat16)
    y = jnp.dot(lhs, bw_ref[...], preferred_element_type=jnp.float32)

    y = y + b_ref[...]
    y = jnp.maximum(y, NEG_SLOPE * y)    # LeakyReLU: vmul + vmax

    # One-pass batch stats: stack per-lane sum and sum-of-squares into a single
    # (2, WC) LHS, then ONE matmul with S (S[i,j] = 1 iff i%Cout == j%Cout)
    # reduces over the W lane-groups and broadcasts back to every lane.
    # TODO(synk): switch to a two-pass / Welford variance if tolerances tighten.
    stats = jnp.concatenate(
        [jnp.sum(y, axis=0, keepdims=True),
         jnp.sum(y * y, axis=0, keepdims=True)], axis=0)          # (2, WC)
    red = jnp.dot(stats, s_ref[...],
                  preferred_element_type=jnp.float32) * (1.0 / count)
    mean = red[0:1, :]
    var = jnp.maximum(red[1:2, :] - mean * mean, 0.0)             # biased var
    return (y - mean) * jax.lax.rsqrt(var + BN_EPS) * g_ref[...] + be_ref[...]


def _down_kernel(n, h, w, cout, pack,
                 x_ref, bw1_ref, b1_ref, g1_ref, be1_ref,
                 bw2_ref, b2_ref, g2_ref, be2_ref,
                 s_ref, psel_ref,
                 pool_ref, skip_ref, pad1_ref, pad2_ref):
    wc = w * cout
    wc2 = (w // 2) * cout
    wcin = x_ref.shape[2]
    count = n * h * w

    # --- in-kernel H-halo for the input (no wrapper-side jnp.pad) ---
    pad1_ref[:, 0:1, :] = jnp.zeros((n, 1, wcin), jnp.float32)
    pad1_ref[:, h + 1:h + 2, :] = jnp.zeros((n, 1, wcin), jnp.float32)
    pad1_ref[:, 1:h + 1, :] = x_ref[...]

    # --- conv block 1 ---
    y1 = _conv_lrelu_bn(pad1_ref, bw1_ref, b1_ref, g1_ref, be1_ref,
                        s_ref, n, h, count)

    # H halo for block 2: zero only the two border rows, one interior store.
    pad2_ref[:, 0:1, :] = jnp.zeros((n, 1, wc), jnp.float32)
    pad2_ref[:, h + 1:h + 2, :] = jnp.zeros((n, 1, wc), jnp.float32)
    pad2_ref[:, 1:h + 1, :] = y1.reshape(n, h, wc)

    # --- conv block 2 -> skip ---
    y2 = _conv_lrelu_bn(pad2_ref, bw2_ref, b2_ref, g2_ref, be2_ref,
                        s_ref, n, h, count)
    skip_ref[...] = y2.reshape(n, h, wc)

    # --- 2x2 / stride-2 max pool ---
    # H direction first: fold row pairs into lanes (vreg-aligned slices) + max.
    z = y2.reshape(n * (h // 2), 2 * wc)
    hmax = jnp.maximum(z[:, :wc], z[:, wc:])                     # (N*H/2, WC)
    # W direction: one bf16 selection matmul handling `pack` H-pooled rows per
    # output row, then max of the two column halves (keeps the store lane-dense).
    hz = hmax.reshape((n * h) // (2 * pack), pack * wc).astype(jnp.bfloat16)
    t = jnp.dot(hz, psel_ref[...], preferred_element_type=jnp.float32)
    pooled = jnp.maximum(t[:, :pack * wc2], t[:, pack * wc2:])
    pool_ref[...] = pooled.reshape(n, h // (2 * pack), pack * wc2)


def _banded_conv_weights(w_hwio, width):
    """(3, 3, cin, cout) -> single (3*width*cin, width*cout) bf16 banded matrix:
    bw[dy*W*cin + s*cin + ci, wo*cout + co] = w[dy, s-wo+1, ci, co]; out-of-range
    dx taps are dropped (implicit zero padding along W)."""
    kh, kw, cin, cout = w_hwio.shape
    shift = np.zeros((kw, width, width), np.float32)
    for dx in range(kw):
        for wo in range(width):
            src = wo + dx - 1
            if 0 <= src < width:
                shift[dx, src, wo] = 1.0
    bw = jnp.einsum('xsd,yxio->ysido', jnp.asarray(shift),
                    w_hwio.astype(jnp.float32))
    return bw.reshape(kh * width * cin, width * cout).astype(jnp.bfloat16)


def _pool_select_matrix(width, cout, pack):
    """(pack*WC, 2*pack*WC2) bf16 selection matrix: columns [0 : pack*WC2) pick
    the even-W lanes of each packed H-row, columns [pack*WC2 : 2*pack*WC2) the
    odd-W lanes; max of the two column halves = W-direction 2-max."""
    wc, wc2 = width * cout, (width // 2) * cout
    eye_c = np.eye(cout, dtype=np.float32)
    e_np = np.zeros((width, width // 2), np.float32)
    o_np = np.zeros((width, width // 2), np.float32)
    e_np[np.arange(0, width, 2), np.arange(width // 2)] = 1.0
    o_np[np.arange(1, width, 2), np.arange(width // 2)] = 1.0
    esel = np.kron(e_np, eye_c)                    # (WC, WC2), exact in bf16
    osel = np.kron(o_np, eye_c)
    psel = np.zeros((pack * wc, 2 * pack * wc2), np.float32)
    for j in range(pack):
        psel[j * wc:(j + 1) * wc, j * wc2:(j + 1) * wc2] = esel
        psel[j * wc:(j + 1) * wc,
             (pack + j) * wc2:(pack + j + 1) * wc2] = osel
    return jnp.asarray(psel, jnp.bfloat16)


def make_params(key, cin, cout):
    ks = jax.random.split(key, 8)
    return dict(
        w1=0.2 * jax.random.normal(ks[0], (3, 3, cin, cout), jnp.float32),
        b1=0.1 * jax.random.normal(ks[1], (cout,), jnp.float32),
        g1=1.0 + 0.1 * jax.random.normal(ks[2], (cout,), jnp.float32),
        be1=0.1 * jax.random.normal(ks[3], (cout,), jnp.float32),
        w2=0.2 * jax.random.normal(ks[4], (3, 3, cout, cout), jnp.float32),
        b2=0.1 * jax.random.normal(ks[5], (cout,), jnp.float32),
        g2=1.0 + 0.1 * jax.random.normal(ks[6], (cout,), jnp.float32),
        be2=0.1 * jax.random.normal(ks[7], (cout,), jnp.float32),
    )


@jax.jit
def down_forward(x_nchw, params):
    N, Cin, H, W = x_nchw.shape
    Cout = params["w1"].shape[-1]
    assert H % 2 == 0 and W % 2 == 0, "max_pool2d(2,2) needs even H, W"
    WCin, WC, WC2 = W * Cin, W * Cout, (W // 2) * Cout
    # Pack two pooled H-rows into lanes while W*Cout/2 < 128 (lane-dense store).
    pack = 2 if (H % 4 == 0 and WC2 < 128) else 1

    # NCHW -> lane-dense (N, H, W*Cin) slab; H halo is padded inside the kernel.
    x = jnp.transpose(x_nchw, (0, 2, 3, 1)).astype(jnp.float32)
    x = x.reshape(N, H, WCin)

    bw1 = _banded_conv_weights(params["w1"], W)        # (3*WCin, WC) bf16
    bw2 = _banded_conv_weights(params["w2"], W)        # (3*WC,   WC) bf16
    psel = _pool_select_matrix(W, Cout, pack)          # bf16, 0/1 exact
    # Per-channel reduce+broadcast matrix for BN stats (kept f32 for accuracy).
    chan_sum = jnp.asarray(np.kron(np.ones((W, W), np.float32),
                                   np.eye(Cout, dtype=np.float32)))

    def tile_c(v):                                     # per-channel -> per-lane
        return jnp.tile(v.astype(jnp.float32), W).reshape(1, WC)

    flops = (2 * N * H * (3 * WCin) * WC                      # conv 1
             + 2 * N * H * (3 * WC) * WC                      # conv 2
             + 2 * (2 * 2 * WC * WC)                          # BN stat reduces
             + 2 * (N * H // (2 * pack)) * (pack * WC) * (2 * pack * WC2))
    bytes_accessed = (4 * (x.size + chan_sum.size + N * H * WC
                           + N * (H // 2) * WC2)
                      + 2 * (bw1.size + bw2.size + psel.size))

    vmem = pl.BlockSpec(memory_space=pltpu.MemorySpace.VMEM)
    kernel = functools.partial(_down_kernel, N, H, W, Cout, pack)
    pool_slab, skip_slab = pl.pallas_call(
        kernel,
        out_shape=(
            jax.ShapeDtypeStruct((N, H // (2 * pack), pack * WC2), jnp.float32),
            jax.ShapeDtypeStruct((N, H, WC), jnp.float32),
        ),
        in_specs=[vmem] * 11,
        out_specs=(vmem, vmem),
        scratch_shapes=[pltpu.VMEM((N, H + 2, WCin), jnp.float32),
                        pltpu.VMEM((N, H + 2, WC), jnp.float32)],
        cost_estimate=pl.CostEstimate(flops=flops, transcendentals=4 * WC,
                                      bytes_accessed=bytes_accessed),
    )(
        x,
        bw1, tile_c(params["b1"]), tile_c(params["g1"]), tile_c(params["be1"]),
        bw2, tile_c(params["b2"]), tile_c(params["g2"]), tile_c(params["be2"]),
        chan_sum, psel,
    )

    # Back to PyTorch NCHW convention: (pooled, skip), like Down.forward.
    skip = jnp.transpose(skip_slab.reshape(N, H, W, Cout), (0, 3, 1, 2))
    pooled = jnp.transpose(pool_slab.reshape(N, H // 2, W // 2, Cout),
                           (0, 3, 1, 2))
    return pooled, skip


def down_reference(x_nchw, params):
    # pure-JAX (f32) reference for correctness checking
    x = jnp.transpose(x_nchw, (0, 2, 3, 1)).astype(jnp.float32)

    def block(x, w, b, g, be):
        y = jax.lax.conv_general_dilated(
            x, w, window_strides=(1, 1), padding="SAME",
            dimension_numbers=("NHWC", "HWIO", "NHWC")) + b
        y = jnp.where(y > 0, y, NEG_SLOPE * y)
        m = jnp.mean(y, axis=(0, 1, 2), keepdims=True)
        v = jnp.mean((y - m) ** 2, axis=(0, 1, 2), keepdims=True)
        return (y - m) / jnp.sqrt(v + BN_EPS) * g + be

    y = block(x, params["w1"], params["b1"], params["g1"], params["be1"])
    s = block(y, params["w2"], params["b2"], params["g2"], params["be2"])
    N, H, W, C = s.shape
    p = jnp.max(s.reshape(N, H // 2, 2, W // 2, 2, C), axis=(2, 4))
    return jnp.transpose(p, (0, 3, 1, 2)), jnp.transpose(s, (0, 3, 1, 2))


if __name__ == "__main__":
    key = jax.random.PRNGKey(0)
    kx, kp = jax.random.split(key)
    N, Cin, Cout, H, W = 2, 4, 8, 16, 16
    x = jax.random.normal(kx, (N, Cin, H, W), jnp.float32)   # NCHW like PyTorch
    params = make_params(kp, Cin, Cout)

    pooled, skip = down_forward(x, params)
    jax.block_until_ready((pooled, skip))

    ref_pooled, ref_skip = down_reference(x, params)
    assert pooled.shape == (N, Cout, H // 2, W // 2)
    assert skip.shape == (N, Cout, H, W)
    # MXU operands are bf16 (f32 accumulation), so tolerance reflects bf16
    # matmul precision; the mean-abs check keeps the comparison meaningful.
    assert jnp.allclose(pooled, ref_pooled, atol=3e-2, rtol=3e-2)
    assert jnp.allclose(skip, ref_skip, atol=3e-2, rtol=3e-2)
    assert float(jnp.mean(jnp.abs(skip - ref_skip))) < 8e-3
    assert float(jnp.mean(jnp.abs(pooled - ref_pooled))) < 8e-3
    print("KERNEL_OK")
</pallas_src>

<mosaic_0001>
module attributes {stable_mosaic.version = 11 : i64} {
  func.func @_down_kernel(%arg0: memref<2x16x64xf32, #tpu.memory_space<vmem>>, %arg1: memref<192x128xbf16, #tpu.memory_space<vmem>>, %arg2: memref<1x128xf32, #tpu.memory_space<vmem>>, %arg3: memref<1x128xf32, #tpu.memory_space<vmem>>, %arg4: memref<1x128xf32, #tpu.memory_space<vmem>>, %arg5: memref<384x128xbf16, #tpu.memory_space<vmem>>, %arg6: memref<1x128xf32, #tpu.memory_space<vmem>>, %arg7: memref<1x128xf32, #tpu.memory_space<vmem>>, %arg8: memref<1x128xf32, #tpu.memory_space<vmem>>, %arg9: memref<128x128xf32, #tpu.memory_space<vmem>>, %arg10: memref<256x256xbf16, #tpu.memory_space<vmem>>, %arg11: memref<2x4x128xf32, #tpu.memory_space<vmem>>, %arg12: memref<2x16x128xf32, #tpu.memory_space<vmem>>, %arg13: memref<2x18x64xf32, #tpu.memory_space<vmem>>, %arg14: memref<2x18x128xf32, #tpu.memory_space<vmem>>) attributes {dimension_semantics = [], scalar_prefetch = 0 : i64, scratch_operands = 2 : i64, tpu.core_type = #tpu.core_type<tc>} {
    %cst = arith.constant 0.000000e+00 : f32
    %0 = vector.broadcast %cst : f32 to vector<2x1x64xf32>
    %c0 = arith.constant 0 : index
    %c0_0 = arith.constant 0 : index
    %c0_1 = arith.constant 0 : index
    %1 = vector.load %arg13[%c0, %c0_0, %c0_1] : memref<2x18x64xf32, #tpu.memory_space<vmem>>, vector<2x1x64xf32>
    tpu.vector_store %arg13[%c0, %c0_0, %c0_1], %0 {strides = array<i32>} : memref<2x18x64xf32, #tpu.memory_space<vmem>>, vector<2x1x64xf32>,
    %cst_2 = arith.constant 0.000000e+00 : f32
    %2 = vector.broadcast %cst_2 : f32 to vector<2x1x64xf32>
    %c0_3 = arith.constant 0 : index
    %c17 = arith.constant 17 : index
    %c0_4 = arith.constant 0 : index
    %3 = vector.load %arg13[%c0_3, %c17, %c0_4] : memref<2x18x64xf32, #tpu.memory_space<vmem>>, vector<2x1x64xf32>
    tpu.vector_store %arg13[%c0_3, %c17, %c0_4], %2 {strides = array<i32>} : memref<2x18x64xf32, #tpu.memory_space<vmem>>, vector<2x1x64xf32>,
    %c0_5 = arith.constant 0 : index
    %c0_6 = arith.constant 0 : index
    %c0_7 = arith.constant 0 : index
    %4 = vector.load %arg0[%c0_5, %c0_6, %c0_7] : memref<2x16x64xf32, #tpu.memory_space<vmem>>, vector<2x16x64xf32>
    %c0_8 = arith.constant 0 : index
    %c1 = arith.constant 1 : index
    %c0_9 = arith.constant 0 : index
    %5 = vector.load %arg13[%c0_8, %c1, %c0_9] : memref<2x18x64xf32, #tpu.memory_space<vmem>>, vector<2x16x64xf32>
    tpu.vector_store %arg13[%c0_8, %c1, %c0_9], %4 {strides = array<i32>} : memref<2x18x64xf32, #tpu.memory_space<vmem>>, vector<2x16x64xf32>,
    %c0_10 = arith.constant 0 : index
    %c0_11 = arith.constant 0 : index
    %c0_12 = arith.constant 0 : index
    %6 = vector.load %arg13[%c0_10, %c0_11, %c0_12] : memref<2x18x64xf32, #tpu.memory_space<vmem>>, vector<2x16x64xf32>
    %7 = vector.shape_cast %6 : vector<2x16x64xf32> to vector<32x64xf32>
    %c0_13 = arith.constant 0 : index
    %c1_14 = arith.constant 1 : index
    %c0_15 = arith.constant 0 : index
    %8 = vector.load %arg13[%c0_13, %c1_14, %c0_15] : memref<2x18x64xf32, #tpu.memory_space<vmem>>, vector<2x16x64xf32>
    %9 = vector.shape_cast %8 : vector<2x16x64xf32> to vector<32x64xf32>
    %c0_16 = arith.constant 0 : index
    %c2 = arith.constant 2 : index
    %c0_17 = arith.constant 0 : index
    %10 = vector.load %arg13[%c0_16, %c2, %c0_17] : memref<2x18x64xf32, #tpu.memory_space<vmem>>, vector<2x16x64xf32>
    %11 = vector.shape_cast %10 : vector<2x16x64xf32> to vector<32x64xf32>
    %12 = tpu.concatenate %7, %9, %11 in 1 : vector<32x64xf32>, vector<32x64xf32>, vector<32x64xf32> -> vector<32x192xf32>
    %13 = arith.truncf %12 : vector<32x192xf32> to vector<32x192xbf16>
    %c0_18 = arith.constant 0 : index
    %c0_19 = arith.constant 0 : index
    %14 = vector.load %arg1[%c0_18, %c0_19] : memref<192x128xbf16, #tpu.memory_space<vmem>>, vector<192x128xbf16>
    %cst_20 = arith.constant dense<0.000000e+00> : vector<32x128xf32>
    %15 = tpu.matmul %13, %14, %cst_20 {dimension_numbers = #tpu.dot_dimension_numbers<[1], [0], [0], [1], [0, 0, 1, 1], [], []>} : vector<32x192xbf16>, vector<192x128xbf16>, vector<32x128xf32> -> vector<32x128xf32>
    %c0_21 = arith.constant 0 : index
    %c0_22 = arith.constant 0 : index
    %16 = vector.load %arg2[%c0_21, %c0_22] : memref<1x128xf32, #tpu.memory_space<vmem>>, vector<1x128xf32>
    %17 = vector.broadcast %16 : vector<1x128xf32> to vector<32x128xf32>
    %18 = arith.addf %15, %17 : vector<32x128xf32>
    %cst_23 = arith.constant 0.00999999977 : f32
    %19 = vector.broadcast %cst_23 : f32 to vector<32x128xf32>
    %20 = arith.mulf %19, %18 : vector<32x128xf32>
    %21 = arith.maximumf %18, %20 : vector<32x128xf32>
    %cst_24 = arith.constant dense<0.000000e+00> : vector<128xf32>
    %22 = vector.multi_reduction <add>, %21, %cst_24 [0] : vector<32x128xf32> to vector<128xf32>
    %23 = vector.shape_cast %22 : vector<128xf32> to vector<1x128xf32>
    %24 = arith.mulf %21, %21 : vector<32x128xf32>
    %cst_25 = arith.constant dense<0.000000e+00> : vector<128xf32>
    %25 = vector.multi_reduction <add>, %24, %cst_25 [0] : vector<32x128xf32> to vector<128xf32>
    %26 = vector.shape_cast %25 : vector<128xf32> to vector<1x128xf32>
    %27 = tpu.concatenate %23, %26 in 0 : vector<1x128xf32>, vector<1x128xf32> -> vector<2x128xf32>
    %c0_26 = arith.constant 0 : index
    %c0_27 = arith.constant 0 : index
    %28 = vector.load %arg9[%c0_26, %c0_27] : memref<128x128xf32, #tpu.memory_space<vmem>>, vector<128x128xf32>
    %cst_28 = arith.constant dense<0.000000e+00> : vector<2x128xf32>
    %29 = tpu.matmul %27, %28, %cst_28 {dimension_numbers = #tpu.dot_dimension_numbers<[1], [0], [0], [1], [0, 0, 1, 1], [], []>} : vector<2x128xf32>, vector<128x128xf32>, vector<2x128xf32> -> vector<2x128xf32>
    %cst_29 = arith.constant 0.001953125 : f32
    %30 = vector.broadcast %cst_29 : f32 to vector<2x128xf32>
    %31 = arith.mulf %29, %30 : vector<2x128xf32>
    %32 = vector.extract_strided_slice %31 {offsets = [0, 0], sizes = [1, 128], strides = [1, 1]} : vector<2x128xf32> to vector<1x128xf32>
    %33 = vector.extract_strided_slice %31 {offsets = [1, 0], sizes = [1, 128], strides = [1, 1]} : vector<2x128xf32> to vector<1x128xf32>
    %34 = arith.mulf %32, %32 : vector<1x128xf32>
    %35 = arith.subf %33, %34 : vector<1x128xf32>
    %cst_30 = arith.constant 0.000000e+00 : f32
    %36 = vector.broadcast %cst_30 : f32 to vector<1x128xf32>
    %37 = arith.maximumf %35, %36 : vector<1x128xf32>
    %38 = vector.broadcast %32 : vector<1x128xf32> to vector<32x128xf32>
    %39 = arith.subf %21, %38 : vector<32x128xf32>
    %cst_31 = arith.constant 9.99999974E-6 : f32
    %40 = vector.broadcast %cst_31 : f32 to vector<1x128xf32>
    %41 = arith.addf %37, %40 : vector<1x128xf32>
    %42 = math.rsqrt %41 : vector<1x128xf32>
    %43 = vector.broadcast %42 : vector<1x128xf32> to vector<32x128xf32>
    %44 = arith.mulf %39, %43 : vector<32x128xf32>
    %c0_32 = arith.constant 0 : index
    %c0_33 = arith.constant 0 : index
    %45 = vector.load %arg3[%c0_32, %c0_33] : memref<1x128xf32, #tpu.memory_space<vmem>>, vector<1x128xf32>
    %46 = vector.broadcast %45 : vector<1x128xf32> to vector<32x128xf32>
    %47 = arith.mulf %44, %46 : vector<32x128xf32>
    %c0_34 = arith.constant 0 : index
    %c0_35 = arith.constant 0 : index
    %48 = vector.load %arg4[%c0_34, %c0_35] : memref<1x128xf32, #tpu.memory_space<vmem>>, vector<1x128xf32>
    %49 = vector.broadcast %48 : vector<1x128xf32> to vector<32x128xf32>
    %50 = arith.addf %47, %49 : vector<32x128xf32>
    %cst_36 = arith.constant 0.000000e+00 : f32
    %51 = vector.broadcast %cst_36 : f32 to vector<2x1x128xf32>
    %c0_37 = arith.constant 0 : index
    %c0_38 = arith.constant 0 : index
    %c0_39 = arith.constant 0 : index
    %52 = vector.load %arg14[%c0_37, %c0_38, %c0_39] : memref<2x18x128xf32, #tpu.memory_space<vmem>>, vector<2x1x128xf32>
    tpu.vector_store %arg14[%c0_37, %c0_38, %c0_39], %51 {strides = array<i32>} : memref<2x18x128xf32, #tpu.memory_space<vmem>>, vector<2x1x128xf32>,
    %cst_40 = arith.constant 0.000000e+00 : f32
    %53 = vector.broadcast %cst_40 : f32 to vector<2x1x128xf32>
    %c0_41 = arith.constant 0 : index
    %c17_42 = arith.constant 17 : index
    %c0_43 = arith.constant 0 : index
    %54 = vector.load %arg14[%c0_41, %c17_42, %c0_43] : memref<2x18x128xf32, #tpu.memory_space<vmem>>, vector<2x1x128xf32>
    tpu.vector_store %arg14[%c0_41, %c17_42, %c0_43], %53 {strides = array<i32>} : memref<2x18x128xf32, #tpu.memory_space<vmem>>, vector<2x1x128xf32>,
    %55 = vector.shape_cast %50 : vector<32x128xf32> to vector<2x16x128xf32>
    %c0_44 = arith.constant 0 : index
    %c1_45 = arith.constant 1 : index
    %c0_46 = arith.constant 0 : index
    %56 = vector.load %arg14[%c0_44, %c1_45, %c0_46] : memref<2x18x128xf32, #tpu.memory_space<vmem>>, vector<2x16x128xf32>
    tpu.vector_store %arg14[%c0_44, %c1_45, %c0_46], %55 {strides = array<i32>} : memref<2x18x128xf32, #tpu.memory_space<vmem>>, vector<2x16x128xf32>,
    %c0_47 = arith.constant 0 : index
    %c0_48 = arith.constant 0 : index
    %c0_49 = arith.constant 0 : index
    %57 = vector.load %arg14[%c0_47, %c0_48, %c0_49] : memref<2x18x128xf32, #tpu.memory_space<vmem>>, vector<2x16x128xf32>
    %58 = vector.shape_cast %57 : vector<2x16x128xf32> to vector<32x128xf32>
    %c0_50 = arith.constant 0 : index
    %c1_51 = arith.constant 1 : index
    %c0_52 = arith.constant 0 : index
    %59 = vector.load %arg14[%c0_50, %c1_51, %c0_52] : memref<2x18x128xf32, #tpu.memory_space<vmem>>, vector<2x16x128xf32>
    %60 = vector.shape_cast %59 : vector<2x16x128xf32> to vector<32x128xf32>
    %c0_53 = arith.constant 0 : index
    %c2_54 = arith.constant 2 : index
    %c0_55 = arith.constant 0 : index
    %61 = vector.load %arg14[%c0_53, %c2_54, %c0_55] : memref<2x18x128xf32, #tpu.memory_space<vmem>>, vector<2x16x128xf32>
    %62 = vector.shape_cast %61 : vector<2x16x128xf32> to vector<32x128xf32>
    %63 = tpu.concatenate %58, %60, %62 in 1 : vector<32x128xf32>, vector<32x128xf32>, vector<32x128xf32> -> vector<32x384xf32>
    %64 = arith.truncf %63 : vector<32x384xf32> to vector<32x384xbf16>
    %c0_56 = arith.constant 0 : index
    %c0_57 = arith.constant 0 : index
    %65 = vector.load %arg5[%c0_56, %c0_57] : memref<384x128xbf16, #tpu.memory_space<vmem>>, vector<384x128xbf16>
    %cst_58 = arith.constant dense<0.000000e+00> : vector<32x128xf32>
    %66 = tpu.matmul %64, %65, %cst_58 {dimension_numbers = #tpu.dot_dimension_numbers<[1], [0], [0], [1], [0, 0, 1, 1], [], []>} : vector<32x384xbf16>, vector<384x128xbf16>, vector<32x128xf32> -> vector<32x128xf32>
    %c0_59 = arith.constant 0 : index
    %c0_60 = arith.constant 0 : index
    %67 = vector.load %arg6[%c0_59, %c0_60] : memref<1x128xf32, #tpu.memory_space<vmem>>, vector<1x128xf32>
    %68 = vector.broadcast %67 : vector<1x128xf32> to vector<32x128xf32>
    %69 = arith.addf %66, %68 : vector<32x128xf32>
    %cst_61 = arith.constant 0.00999999977 : f32
    %70 = vector.broadcast %cst_61 : f32 to vector<32x128xf32>
    %71 = arith.mulf %70, %69 : vector<32x128xf32>
    %72 = arith.maximumf %69, %71 : vector<32x128xf32>
    %cst_62 = arith.constant dense<0.000000e+00> : vector<128xf32>
    %73 = vector.multi_reduction <add>, %72, %cst_62 [0] : vector<32x128xf32> to vector<128xf32>
    %74 = vector.shape_cast %73 : vector<128xf32> to vector<1x128xf32>
    %75 = arith.mulf %72, %72 : vector<32x128xf32>
    %cst_63 = arith.constant dense<0.000000e+00> : vector<128xf32>
    %76 = vector.multi_reduction <add>, %75, %cst_63 [0] : vector<32x128xf32> to vector<128xf32>
    %77 = vector.shape_cast %76 : vector<128xf32> to vector<1x128xf32>
    %78 = tpu.concatenate %74, %77 in 0 : vector<1x128xf32>, vector<1x128xf32> -> vector<2x128xf32>
    %c0_64 = arith.constant 0 : index
    %c0_65 = arith.constant 0 : index
    %79 = vector.load %arg9[%c0_64, %c0_65] : memref<128x128xf32, #tpu.memory_space<vmem>>, vector<128x128xf32>
    %cst_66 = arith.constant dense<0.000000e+00> : vector<2x128xf32>
    %80 = tpu.matmul %78, %79, %cst_66 {dimension_numbers = #tpu.dot_dimension_numbers<[1], [0], [0], [1], [0, 0, 1, 1], [], []>} : vector<2x128xf32>, vector<128x128xf32>, vector<2x128xf32> -> vector<2x128xf32>
    %cst_67 = arith.constant 0.001953125 : f32
    %81 = vector.broadcast %cst_67 : f32 to vector<2x128xf32>
    %82 = arith.mulf %80, %81 : vector<2x128xf32>
    %83 = vector.extract_strided_slice %82 {offsets = [0, 0], sizes = [1, 128], strides = [1, 1]} : vector<2x128xf32> to vector<1x128xf32>
    %84 = vector.extract_strided_slice %82 {offsets = [1, 0], sizes = [1, 128], strides = [1, 1]} : vector<2x128xf32> to vector<1x128xf32>
    %85 = arith.mulf %83, %83 : vector<1x128xf32>
    %86 = arith.subf %84, %85 : vector<1x128xf32>
    %cst_68 = arith.constant 0.000000e+00 : f32
    %87 = vector.broadcast %cst_68 : f32 to vector<1x128xf32>
    %88 = arith.maximumf %86, %87 : vector<1x128xf32>
    %89 = vector.broadcast %83 : vector<1x128xf32> to vector<32x128xf32>
    %90 = arith.subf %72, %89 : vector<32x128xf32>
    %cst_69 = arith.constant 9.99999974E-6 : f32
    %91 = vector.broadcast %cst_69 : f32 to vector<1x128xf32>
    %92 = arith.addf %88, %91 : vector<1x128xf32>
    %93 = math.rsqrt %92 : vector<1x128xf32>
    %94 = vector.broadcast %93 : vector<1x128xf32> to vector<32x128xf32>
    %95 = arith.mulf %90, %94 : vector<32x128xf32>
    %c0_70 = arith.constant 0 : index
    %c0_71 = arith.constant 0 : index
    %96 = vector.load %arg7[%c0_70, %c0_71] : memref<1x128xf32, #tpu.memory_space<vmem>>, vector<1x128xf32>
    %97 = vector.broadcast %96 : vector<1x128xf32> to vector<32x128xf32>
    %98 = arith.mulf %95, %97 : vector<32x128xf32>
    %c0_72 = arith.constant 0 : index
    %c0_73 = arith.constant 0 : index
    %99 = vector.load %arg8[%c0_72, %c0_73] : memref<1x128xf32, #tpu.memory_space<vmem>>, vector<1x128xf32>
    %100 = vector.broadcast %99 : vector<1x128xf32> to vector<32x128xf32>
    %101 = arith.addf %98, %100 : vector<32x128xf32>
    %102 = vector.shape_cast %101 : vector<32x128xf32> to vector<2x16x128xf32>
    %c0_74 = arith.constant 0 : index
    %c0_75 = arith.constant 0 : index
    %c0_76 = arith.constant 0 : index
    %103 = vector.load %arg12[%c0_74, %c0_75, %c0_76] : memref<2x16x128xf32, #tpu.memory_space<vmem>>, vector<2x16x128xf32>
    tpu.vector_store %arg12[%c0_74, %c0_75, %c0_76], %102 {strides = array<i32>} : memref<2x16x128xf32, #tpu.memory_space<vmem>>, vector<2x16x128xf32>,
    %104 = vector.shape_cast %101 : vector<32x128xf32> to vector<16x256xf32>
    %105 = vector.extract_strided_slice %104 {offsets = [0, 0], sizes = [16, 128], strides = [1, 1]} : vector<16x256xf32> to vector<16x128xf32>
    %106 = vector.extract_strided_slice %104 {offsets = [0, 128], sizes = [16, 128], strides = [1, 1]} : vector<16x256xf32> to vector<16x128xf32>
    %107 = arith.maximumf %105, %106 : vector<16x128xf32>
    %108 = vector.shape_cast %107 : vector<16x128xf32> to vector<8x256xf32>
    %109 = arith.truncf %108 : vector<8x256xf32> to vector<8x256xbf16>
    %c0_77 = arith.constant 0 : index
    %c0_78 = arith.constant 0 : index
    %110 = vector.load %arg10[%c0_77, %c0_78] : memref<256x256xbf16, #tpu.memory_space<vmem>>, vector<256x256xbf16>
    %cst_79 = arith.constant dense<0.000000e+00> : vector<8x256xf32>
    %111 = tpu.matmul %109, %110, %cst_79 {dimension_numbers = #tpu.dot_dimension_numbers<[1], [0], [0], [1], [0, 0, 1, 1], [], []>} : vector<8x256xbf16>, vector<256x256xbf16>, vector<8x256xf32> -> vector<8x256xf32>
    %112 = vector.extract_strided_slice %111 {offsets = [0, 0], sizes = [8, 128], strides = [1, 1]} : vector<8x256xf32> to vector<8x128xf32>
    %113 = vector.extract_strided_slice %111 {offsets = [0, 128], sizes = [8, 128], strides = [1, 1]} : vector<8x256xf32> to vector<8x128xf32>
    %114 = arith.maximumf %112, %113 : vector<8x128xf32>
    %115 = vector.shape_cast %114 : vector<8x128xf32> to vector<2x4x128xf32>
    %c0_80 = arith.constant 0 : index
    %c0_81 = arith.constant 0 : index
    %c0_82 = arith.constant 0 : index
    %116 = vector.load %arg11[%c0_80, %c0_81, %c0_82] : memref<2x4x128xf32, #tpu.memory_space<vmem>>, vector<2x4x128xf32>
    tpu.vector_store %arg11[%c0_80, %c0_81, %c0_82], %115 {strides = array<i32>} : memref<2x4x128xf32, #tpu.memory_space<vmem>>, vector<2x4x128xf32>,
    return
  }
}

</mosaic_0001>

<llo_original>
// kernel: tile.33
$region0: #{tile.33}
  #allocation0 [shape = 's32[1]{0}', space=sflag, size = 0x4, scoped, tag = 'scoped memory for tile.33']
  %s0 = inlined_call_operand.vmem [shape: f32[8], index: 0, kind: input, shape index: {}]
  %s1 = inlined_call_operand.vmem [shape: f32[16,8], index: 1, kind: output, shape index: {}]
  // Predicated region
  $region2: #{tile.33} parent=0 // pred_check
    _
  $region3: #{tile.33} parent=0 // pred_check_branch
    %3 = sbr.rel (0) target = $region5
  $region4: #{tile.33} parent=0 // pred_region
    _
  $region5: #{tile.33} parent=0 // pred_fallthru
    _
  %v4 = vld [vmem:[%s0] ss:$0 sm:$0xff]
  %5 = vst [vmem:[%s1] sm:$0xff] %v4
  %s6 = scalar_lea.vmem %s1, 8
  %7 = vst [vmem:[%s6] sm:$0xff] %v4

// kernel: tile.34
$region0: #{tile.34}
  %s0 = inlined_call_operand.vmem [shape: f32[16,8], index: 0, kind: input, shape index: {}]
  %s1 = inlined_call_operand.vmem [shape: f32[1,128], index: 1, kind: output, shape index: {}]
  $region1: #{tile.34} parent=0
    #allocation0 [shape = 'u8[4096]{0}', space=vmem, size = 0x1000, scoped, tag = 'scoped mem for output reshape']
    %v2 = vld [vmem:[%s0] sm:$0x1]
    %vm3 = vcmask 64512
    %4 = vst.msk [vmem:[#allocation0] sm:$0x1] %vm3, %v2
    %s5 = scalar_lea.vmem %s0, 15
    %v6 = vld [vmem:[%s5] sm:$0x1]
    %7 = vrot.lane.b32.xlu0 %v6, 120
    %v8 = vpop.permute.xlu0 %7
    %vm9 = vcmask 1048512
    %10 = vst.msk [vmem:[#allocation0] sm:$0x1] %vm9, %v8
    %s11 = scalar_lea.vmem %s0, 14
    %v12 = vld [vmem:[%s11] sm:$0x1]
    %13 = vrot.lane.b32.xlu0 %v12, 112
    %v14 = vpop.permute.xlu0 %13
    %vm15 = vcmask 982912
    %16 = vst.msk [vmem:[#allocation0] sm:$0x1] %vm15, %v14
    %s17 = scalar_lea.vmem %s0, 13
    %v18 = vld [vmem:[%s17] sm:$0x1]
    %19 = vrot.lane.b32.xlu0 %v18, 104
    %v20 = vpop.permute.xlu0 %19
    %vm21 = vcmask 917312
    %22 = vst.msk [vmem:[#allocation0] sm:$0x1] %vm21, %v20
    %s23 = scalar_lea.vmem %s0, 12
    %v24 = vld [vmem:[%s23] sm:$0x1]
    %25 = vrot.lane.b32.xlu0 %v24, 96
    %v26 = vpop.permute.xlu0 %25
    %vm27 = vcmask 851712
    %28 = vst.msk [vmem:[#allocation0] sm:$0x1] %vm27, %v26
    %s29 = scalar_lea.vmem %s0, 11
    %v30 = vld [vmem:[%s29] sm:$0x1]
    %31 = vrot.lane.b32.xlu0 %v30, 88
    %v32 = vpop.permute.xlu0 %31
    %vm33 = vcmask 786112
    %34 = vst.msk [vmem:[#allocation0] sm:$0x1] %vm33, %v32
    %s35 = scalar_lea.vmem %s0, 10
    %v36 = vld [vmem:[%s35] sm:$0x1]
    %37 = vrot.lane.b32.xlu0 %v36, 80
    %v38 = vpop.permute.xlu0 %37
    %vm39 = vcmask 720512
    %40 = vst.msk [vmem:[#allocation0] sm:$0x1] %vm39, %v38
    %s41 = scalar_lea.vmem %s0, 9
    %v42 = vld [vmem:[%s41] sm:$0x1]
    %43 = vrot.lane.b32.xlu0 %v42, 72
    %v44 = vpop.permute.xlu0 %43
    %vm45 = vcmask 654912
    %46 = vst.msk [vmem:[#allocation0] sm:$0x1] %vm45, %v44
    %s47 = scalar_lea.vmem %s0, 8
    %v48 = vld [vmem:[%s47] sm:$0x1]
    %49 = vrot.lane.b32.xlu0 %v48, 64
    %v50 = vpop.permute.xlu0 %49
    %vm51 = vcmask 589312
    %52 = vst.msk [vmem:[#allocation0] sm:$0x1] %vm51, %v50
    %s53 = scalar_lea.vmem %s0, 7
    %v54 = vld [vmem:[%s53] sm:$0x1]
    %55 = vrot.lane.b32.xlu0 %v54, 56
    %v56 = vpop.permute.xlu0 %55
    %vm57 = vcmask 523712
    %58 = vst.msk [vmem:[#allocation0] sm:$0x1] %vm57, %v56
    %s59 = scalar_lea.vmem %s0, 6
    %v60 = vld [vmem:[%s59] sm:$0x1]
    %61 = vrot.lane.b32.xlu0 %v60, 48
    %v62 = vpop.permute.xlu0 %61
    %vm63 = vcmask 458112
    %64 = vst.msk [vmem:[#allocation0] sm:$0x1] %vm63, %v62
    %s65 = scalar_lea.vmem %s0, 5
    %v66 = vld [vmem:[%s65] sm:$0x1]
    %67 = vrot.lane.b32.xlu0 %v66, 40
    %v68 = vpop.permute.xlu0 %67
    %vm69 = vcmask 392512
    %70 = vst.msk [vmem:[#allocation0] sm:$0x1] %vm69, %v68
    %s71 = scalar_lea.vmem %s0, 4
    %v72 = vld [vmem:[%s71] sm:$0x1]
    %73 = vrot.lane.b32.xlu0 %v72, 32
    %v74 = vpop.permute.xlu0 %73
    %vm75 = vcmask 326912
    %76 = vst.msk [vmem:[#allocation0] sm:$0x1] %vm75, %v74
    %s77 = scalar_lea.vmem %s0, 3
    %v78 = vld [vmem:[%s77] sm:$0x1]
    %79 = vrot.lane.b32.xlu0 %v78, 24
    %v80 = vpop.permute.xlu0 %79
    %vm81 = vcmask 261312
    %82 = vst.msk [vmem:[#allocation0] sm:$0x1] %vm81, %v80
    %s83 = scalar_lea.vmem %s0, 2
    %v84 = vld [vmem:[%s83] sm:$0x1]
    %85 = vrot.lane.b32.xlu0 %v84, 16
    %v86 = vpop.permute.xlu0 %85
    %vm87 = vcmask 195712
    %88 = vst.msk [vmem:[#allocation0] sm:$0x1] %vm87, %v86
    %s89 = scalar_lea.vmem %s0, 1
    %v90 = vld [vmem:[%s89] sm:$0x1]
    %91 = vrot.lane.b32.xlu0 %v90, 8
    %v92 = vpop.permute.xlu0 %91
    %vm93 = vcmask 130112
    %94 = vst.msk [vmem:[#allocation0] sm:$0x1] %vm93, %v92
    %s96 = sshll.u32 1, 1
    %s97 = ssub.s32 %s96, 1
    %v99 = vld [vmem:[#allocation0] sm:%s97]
    %s100 = sshll.u32 1, 1
    %s101 = ssub.s32 %s100, 1
    %102 = vst [vmem:[%s1] sm:%s101] %v99

// kernel: down_forward.1
$region0: #{down_forward.1}
  #allocation0 [shape = 'u32[]', space=smem, size = 0x4, offset = 0x4, fixed_abs, tag = 'smem constant byte address 0x4 - core index']
  #allocation1 [shape = 'u32[144,128]{1,0:T(1,128)}', space=vmem, size = 0x12000, scoped, tag = 'internal scratch']
  #allocation2 [shape = 'f32[2,18,64]{2,1,0:T(8,128)}', space=vmem, size = 0x6000, scoped, tag = 'scratch operand']
  #allocation3 [shape = 'f32[2,18,128]{2,1,0:T(8,128)}', space=vmem, size = 0x6000, scoped, tag = 'scratch operand']
  %s0 = inlined_call_operand.vmem [shape: f32[2,16,64], index: 0, kind: input, shape index: {}]
  %s1 = inlined_call_operand.vmem [shape: bf16[192,128], index: 1, kind: input, shape index: {}]
  %s2 = inlined_call_operand.vmem [shape: f32[1,128], index: 2, kind: input, shape index: {}]
  %s3 = inlined_call_operand.vmem [shape: f32[1,128], index: 3, kind: input, shape index: {}]
  %s4 = inlined_call_operand.vmem [shape: f32[1,128], index: 4, kind: input, shape index: {}]
  %s5 = inlined_call_operand.vmem [shape: bf16[384,128], index: 5, kind: input, shape index: {}]
  %s6 = inlined_call_operand.vmem [shape: f32[1,128], index: 6, kind: input, shape index: {}]
  %s7 = inlined_call_operand.vmem [shape: f32[1,128], index: 7, kind: input, shape index: {}]
  %s8 = inlined_call_operand.vmem [shape: f32[1,128], index: 8, kind: input, shape index: {}]
  %s9 = inlined_call_operand.vmem [shape: f32[128,128], index: 9, kind: input, shape index: {}]
  %s10 = inlined_call_operand.vmem [shape: bf16[256,256], index: 10, kind: input, shape index: {}]
  %s11 = inlined_call_operand.vmem [shape: f32[2,4,128], index: 11, kind: output, shape index: {0}]
  %s12 = inlined_call_operand.vmem [shape: f32[2,16,128], index: 12, kind: output, shape index: {1}]
  %13 = xla_tuple %s11, %s12
  %s14 = sld [smem:[#allocation0]]
  $region62: #{down_forward.1} parent=0
    _
  %s16 = ssub.s32 1, %s14
  %s17 = scalar_select 0, %s16, %s14
  // Predicated region
  $region2: #{down_forward.1} parent=0 // pred_check
    _
  $region3: #{down_forward.1} parent=0 // pred_check_branch
    %19 = sbr.rel (0) target = $region5
  $region4: #{down_forward.1} parent=0 // pred_region
    _
  $region5: #{down_forward.1} parent=0 // pred_fallthru
    _
  // Predicated region
  $region6: #{down_forward.1} parent=0 // pred_check
    _
  $region7: #{down_forward.1} parent=0 // pred_check_branch
    %21 = sbr.rel (0) target = $region9
  $region8: #{down_forward.1} parent=0 // pred_region
    _
  $region9: #{down_forward.1} parent=0 // pred_fallthru
    _
  // Predicated region
  $region10: #{down_forward.1} parent=0 // pred_check
    _
  $region11: #{down_forward.1} parent=0 // pred_check_branch
    %23 = sbr.rel (0) target = $region13
  $region12: #{down_forward.1} parent=0 // pred_region
    _
  $region13: #{down_forward.1} parent=0 // pred_fallthru
    _
  // Predicated region
  $region14: #{down_forward.1} parent=0 // pred_check
    _
  $region15: #{down_forward.1} parent=0 // pred_check_branch
    %25 = sbr.rel (0) target = $region17
  $region16: #{down_forward.1} parent=0 // pred_region
    _
  $region17: #{down_forward.1} parent=0 // pred_fallthru
    _
  // Predicated region
  $region18: #{down_forward.1} parent=0 // pred_check
    _
  $region19: #{down_forward.1} parent=0 // pred_check_branch
    %27 = sbr.rel (0) target = $region21
  $region20: #{down_forward.1} parent=0 // pred_region
    _
  $region21: #{down_forward.1} parent=0 // pred_fallthru
    _
  // Predicated region
  $region22: #{down_forward.1} parent=0 // pred_check
    _
  $region23: #{down_forward.1} parent=0 // pred_check_branch
    %29 = sbr.rel (0) target = $region25
  $region24: #{down_forward.1} parent=0 // pred_region
    _
  $region25: #{down_forward.1} parent=0 // pred_fallthru
    _
  // Predicated region
  $region26: #{down_forward.1} parent=0 // pred_check
    _
  $region27: #{down_forward.1} parent=0 // pred_check_branch
    %31 = sbr.rel (0) target = $region29
  $region28: #{down_forward.1} parent=0 // pred_region
    _
  $region29: #{down_forward.1} parent=0 // pred_fallthru
    _
  // Predicated region
  $region30: #{down_forward.1} parent=0 // pred_check
    _
  $region31: #{down_forward.1} parent=0 // pred_check_branch
    %33 = sbr.rel (0) target = $region33
  $region32: #{down_forward.1} parent=0 // pred_region
    _
  $region33: #{down_forward.1} parent=0 // pred_fallthru
    _
  // Predicated region
  $region34: #{down_forward.1} parent=0 // pred_check
    _
  $region35: #{down_forward.1} parent=0 // pred_check_branch
    %35 = sbr.rel (0) target = $region37
  $region36: #{down_forward.1} parent=0 // pred_region
    _
  $region37: #{down_forward.1} parent=0 // pred_fallthru
    _
  // Predicated region
  $region38: #{down_forward.1} parent=0 // pred_check
    _
  $region39: #{down_forward.1} parent=0 // pred_check_branch
    %37 = sbr.rel (0) target = $region41
  $region40: #{down_forward.1} parent=0 // pred_region
    _
  $region41: #{down_forward.1} parent=0 // pred_fallthru
    _
  // Predicated region
  $region42: #{down_forward.1} parent=0 // pred_check
    _
  $region43: #{down_forward.1} parent=0 // pred_check_branch
    %39 = sbr.rel (0) target = $region45
  $region44: #{down_forward.1} parent=0 // pred_region
    _
  $region45: #{down_forward.1} parent=0 // pred_fallthru
    _
  %vm41 = vcmask 516096
  %42 = vst.msk [vmem:[#allocation2] sm:$0x1] %vm41, 0.0
  %43 = vst.msk [vmem:[#allocation2 + $0x18] sm:$0x1] %vm41, 0.0
  %44 = vst.msk [vmem:[#allocation2 + $0x11] sm:$0x1] %vm41, 0.0
  %45 = vst.msk [vmem:[#allocation2 + $0x29] sm:$0x1] %vm41, 0.0
  %v46 = vld [vmem:[%s0] sm:$0xff]
  %v47 = vld [vmem:[%s0 + $0x8] sm:$0xff]
  %v48 = vld [vmem:[%s0 + $0x10] sm:$0xff]
  %v49 = vld [vmem:[%s0 + $0x18] sm:$0xff]
  %vm50 = vcmask 523264
  %51 = vst.msk [vmem:[#allocation2 + $0x1] sm:$0xff] %vm50, %v46
  %52 = vst.msk [vmem:[#allocation2 + $0x9] sm:$0xff] %vm50, %v47
  %53 = vst.msk [vmem:[#allocation2 + $0x19] sm:$0xff] %vm50, %v48
  %54 = vst.msk [vmem:[#allocation2 + $0x21] sm:$0xff] %vm50, %v49
  %v55 = vld [vmem:[#allocation2] sm:$0xff]
  %v56 = vld [vmem:[#allocation2 + $0x8] sm:$0xff]
  %v57 = vld [vmem:[#allocation2 + $0x18] sm:$0xff]
  %v58 = vld [vmem:[#allocation2 + $0x20] sm:$0xff]
  %v59 = vld [vmem:[#allocation2 + $0x1] sm:$0xff]
  %v60 = vld [vmem:[#allocation2 + $0x9] sm:$0xff]
  %v61 = vld [vmem:[#allocation2 + $0x19] sm:$0xff]
  %v62 = vld [vmem:[#allocation2 + $0x21] sm:$0xff]
  %v63 = vld [vmem:[#allocation2 + $0x2] sm:$0xff]
  %v64 = vld [vmem:[#allocation2 + $0xa] sm:$0xff]
  %v65 = vld [vmem:[#allocation2 + $0x1a] sm:$0xff]
  %v66 = vld [vmem:[#allocation2 + $0x22] sm:$0xff]
  %71 = vrot.lane.b32.xlu0 %v59, 64
  %v72 = vpop.permute.xlu0 %71
  %73 = vrot.lane.b32.xlu0 %v60, 64
  %v74 = vpop.permute.xlu0 %73
  %75 = vrot.lane.b32.xlu0 %v61, 64
  %v76 = vpop.permute.xlu0 %75
  %77 = vrot.lane.b32.xlu0 %v62, 64
  %v78 = vpop.permute.xlu0 %77
  %v83 = vsel %vm50, %v55, %v72
  %v84 = vsel %vm50, %v56, %v74
  %v85 = vsel %vm50, %v57, %v76
  %v86 = vsel %vm50, %v58, %v78
  %v87 = vpack.c.bf16 %v84, %v83
  %v88 = vpack.c.bf16 %v64, %v63
  %v89 = vpack.c.bf16 %v86, %v85
  %v90 = vpack.c.bf16 %v66, %v65
  %v91 = vld [vmem:[%s1] sm:$0xf]
  %v92 = vld [vmem:[%s1 + $0x4] sm:$0xf]
  %v93 = vld [vmem:[%s1 + $0x8] sm:$0xf]
  %v94 = vld [vmem:[%s1 + $0xc] sm:$0xf]
  %v95 = vld [vmem:[%s1 + $0x10] sm:$0xf]
  %v96 = vld [vmem:[%s1 + $0x14] sm:$0xf]
  %v97 = vld [vmem:[%s1 + $0x18] sm:$0xf]
  %v98 = vld [vmem:[%s1 + $0x1c] sm:$0xf]
  %v99 = vld [vmem:[%s1 + $0x20] sm:$0xf]
  %v100 = vld [vmem:[%s1 + $0x24] sm:$0xf]
  %v101 = vld [vmem:[%s1 + $0x28] sm:$0xf]
  %v102 = vld [vmem:[%s1 + $0x2c] sm:$0xf]
  %v103 = vld [vmem:[%s1 + $0x30] sm:$0xf]
  %v104 = vld [vmem:[%s1 + $0x34] sm:$0xf]
  %v105 = vld [vmem:[%s1 + $0x38] sm:$0xf]
  %v106 = vld [vmem:[%s1 + $0x3c] sm:$0xf]
  %v107 = vld [vmem:[%s1 + $0x40] sm:$0xf]
  %v108 = vld [vmem:[%s1 + $0x44] sm:$0xf]
  %v109 = vld [vmem:[%s1 + $0x48] sm:$0xf]
  %v110 = vld [vmem:[%s1 + $0x4c] sm:$0xf]
  %v111 = vld [vmem:[%s1 + $0x50] sm:$0xf]
  %v112 = vld [vmem:[%s1 + $0x54] sm:$0xf]
  %v113 = vld [vmem:[%s1 + $0x58] sm:$0xf]
  %v114 = vld [vmem:[%s1 + $0x5c] sm:$0xf]
  %v115 = vld [vmem:[%s2] sm:$0x1]
  %v117 = vlaneseq
  %v118 = vshrl.u32 %v117, 7
  %v119 = vsub.s32 0, %v118
  %v120 = vrot.slane %v115, %v119
  %v146 = vunpack.c.l.b16 %v91
  %v147 = vunpack.c.l.b16 %v92
  %v148 = vunpack.c.l.b16 %v93
  %v149 = vunpack.c.l.b16 %v94
  %v150 = vunpack.c.l.b16 %v95
  %v151 = vunpack.c.l.b16 %v96
  %v152 = vunpack.c.l.b16 %v97
  %v153 = vunpack.c.l.b16 %v98
  %v154 = vunpack.c.l.b16 %v99
  %v155 = vunpack.c.l.b16 %v100
  %v156 = vunpack.c.l.b16 %v101
  %v157 = vunpack.c.l.b16 %v102
  %v158 = vunpack.c.l.b16 %v103
  %v159 = vunpack.c.l.b16 %v104
  %v160 = vunpack.c.l.b16 %v105
  %v161 = vunpack.c.l.b16 %v106
  %v162 = vunpack.c.l.b16 %v107
  %v163 = vunpack.c.l.b16 %v108
  %v164 = vunpack.c.l.b16 %v109
  %v165 = vunpack.c.l.b16 %v110
  %v166 = vunpack.c.l.b16 %v111
  %v167 = vunpack.c.l.b16 %v112
  %v168 = vunpack.c.l.b16 %v113
  %v169 = vunpack.c.l.b16 %v114
  %v170 = vpack.c.b16 %v147, %v146
  %v171 = vpack.c.b16 %v149, %v148
  %v172 = vpack.c.b16 %v151, %v150
  %v173 = vpack.c.b16 %v153, %v152
  %v174 = vpack.c.b16 %v155, %v154
  %v175 = vpack.c.b16 %v157, %v156
  %v176 = vpack.c.b16 %v159, %v158
  %v177 = vpack.c.b16 %v161, %v160
  %v178 = vpack.c.b16 %v163, %v162
  %v179 = vpack.c.b16 %v165, %v164
  %v180 = vpack.c.b16 %v167, %v166
  %v181 = vpack.c.b16 %v169, %v168
  %v195 = vsel %vm50, %v88, 0
  %v198 = vsel %vm50, %v90, 0
  %200 = vmatprep.subr.bf16.mxu0 0
  %201 = vmatpush1.bf16.msra.mxu0 %v177
  %202 = vmatprep.subr.bf16.mxu0 0
  %203 = vmatpush1.bf16.msra.mxu0 %v176
  %204 = vmatprep.subr.bf16.mxu0 0
  %205 = vmatpush1.bf16.msra.mxu0 %v175
  %206 = vmatprep.subr.bf16.mxu0 0
  %207 = vmatpush1.bf16.msra.mxu0 %v174
  %208 = vmatprep.subr.bf16.mxu0 0
  %209 = vmatpush1.bf16.msra.mxu0 %v173
  %210 = vmatprep.subr.bf16.mxu0 0
  %211 = vmatpush1.bf16.msra.mxu0 %v172
  %212 = vmatprep.subr.bf16.mxu0 0
  %213 = vmatpush1.bf16.msra.mxu0 %v171
  %214 = vmatprep.subr.bf16.mxu0 0
  %215 = vmatpush1.bf16.msra.mxu0 %v170
  %216 = vmatprep.subr.bf16.mxu0 0
  %217 = vmatpush2.bf16.msra.mxu0 0
  %218 = vmatprep.subr.bf16.mxu0 0
  %219 = vmatpush2.bf16.msra.mxu0 0
  %220 = vmatprep.subr.bf16.mxu0 0
  %221 = vmatpush2.bf16.msra.mxu0 0
  %222 = vmatprep.subr.bf16.mxu0 0
  %223 = vmatpush2.bf16.msra.mxu0 0
  %224 = vmatprep.subr.bf16.mxu0 0
  %225 = vmatpush2.bf16.msra.mxu0 %v181
  %226 = vmatprep.subr.bf16.mxu0 0
  %227 = vmatpush2.bf16.msra.mxu0 %v180
  %228 = vmatprep.subr.bf16.mxu0 0
  %229 = vmatpush2.bf16.msra.mxu0 %v179
  %230 = vmatprep.subr.bf16.mxu0 0
  %231 = vmatpush2.bf16.msra.mxu0 %v178
  %232 = vmatprep.mubr.bf16.mxu0 %v195
  %233 = vmatmul.mubr.bf16.gmra.mxu0 %v87
  %v234 = vpop.f32.mrf.mxu0
  %v235 = vadd.f32 %v120, %v234
  %v236 = vpop.f32.mrf.mxu0
  %v237 = vpop.f32.mrf.mxu0
  %v238 = vadd.f32 %v120, %v237
  %v239 = vpop.f32.mrf.mxu0
  %240 = vmatprep.mubr.bf16.mxu0 %v198
  %241 = vmatmul.mubr.bf16.gmra.mxu0 %v89
  %v242 = vpop.f32.mrf.mxu0
  %v243 = vadd.f32 %v120, %v242
  %v244 = vpop.f32.mrf.mxu0
  %v245 = vpop.f32.mrf.mxu0
  %v246 = vadd.f32 %v120, %v245
  %v247 = vpop.f32.mrf.mxu0
  %248 = vdwg.mxu0
  %v249 = vmul.f32 %v235, 0.01
  %v250 = vmul.f32 %v238, 0.01
  %v251 = vmul.f32 %v243, 0.01
  %v252 = vmul.f32 %v246, 0.01
  %v253 = vmax.f32 %v235, %v249
  %v254 = vmax.f32 %v238, %v250
  %v255 = vmax.f32 %v243, %v251
  %v256 = vmax.f32 %v246, %v252
  %v257 = vadd.f32 %v253, %v254
  %v258 = vadd.f32 %v257, %v255
  %v259 = vadd.f32 %v258, %v256
  %v260 = vrot.slane %v259, 4
  %v261 = vadd.f32 %v259, %v260
  %v262 = vrot.slane %v261, 2
  %v263 = vadd.f32 %v261, %v262
  %v264 = vrot.slane %v263, 1
  %v265 = vadd.f32 %v263, %v264
  %v266 = vmul.f32 %v253, %v253
  %v267 = vmul.f32 %v254, %v254
  %v268 = vmul.f32 %v255, %v255
  %v269 = vmul.f32 %v256, %v256
  %v270 = vadd.f32 %v266, %v267
  %v271 = vadd.f32 %v270, %v268
  %v272 = vadd.f32 %v271, %v269
  %v273 = vrot.slane %v272, 4
  %v274 = vadd.f32 %v272, %v273
  %v275 = vrot.slane %v274, 2
  %v276 = vadd.f32 %v274, %v275
  %v277 = vrot.slane %v276, 1
  %v278 = vadd.f32 %v276, %v277
  %vm279 = vcmask 1040384
  %v280 = vsel %vm279, %v265, %v278
  %v281 = vld [vmem:[%s9] sm:$0xff]
  %v282 = vld [vmem:[%s9 + $0x8] sm:$0xff]
  %v283 = vld [vmem:[%s9 + $0x10] sm:$0xff]
  %v284 = vld [vmem:[%s9 + $0x18] sm:$0xff]
  %v285 = vld [vmem:[%s9 + $0x20] sm:$0xff]
  %v286 = vld [vmem:[%s9 + $0x28] sm:$0xff]
  %v287 = vld [vmem:[%s9 + $0x30] sm:$0xff]
  %v288 = vld [vmem:[%s9 + $0x38] sm:$0xff]
  %v289 = vld [vmem:[%s9 + $0x40] sm:$0xff]
  %v290 = vld [vmem:[%s9 + $0x48] sm:$0xff]
  %v291 = vld [vmem:[%s9 + $0x50] sm:$0xff]
  %v292 = vld [vmem:[%s9 + $0x58] sm:$0xff]
  %v293 = vld [vmem:[%s9 + $0x60] sm:$0xff]
  %v294 = vld [vmem:[%s9 + $0x68] sm:$0xff]
  %v295 = vld [vmem:[%s9 + $0x70] sm:$0xff]
  %v296 = vld [vmem:[%s9 + $0x78] sm:$0xff]
  %297 = vmatprep.subr.mxu0 0.0
  %298 = vmatpush1.msra.mxu0 %v296
  %299 = vmatprep.subr.mxu0 0.0
  %300 = vmatpush1.msra.mxu0 %v295
  %301 = vmatprep.subr.mxu0 0.0
  %302 = vmatpush1.msra.mxu0 %v294
  %303 = vmatprep.subr.mxu0 0.0
  %304 = vmatpush1.msra.mxu0 %v293
  %305 = vmatprep.subr.mxu0 0.0
  %306 = vmatpush1.msra.mxu0 %v292
  %307 = vmatprep.subr.mxu0 0.0
  %308 = vmatpush1.msra.mxu0 %v291
  %309 = vmatprep.subr.mxu0 0.0
  %310 = vmatpush1.msra.mxu0 %v290
  %311 = vmatprep.subr.mxu0 0.0
  %312 = vmatpush1.msra.mxu0 %v289
  %313 = vmatprep.subr.mxu0 0.0
  %314 = vmatpush1.msra.mxu0 %v288
  %315 = vmatprep.subr.mxu0 0.0
  %316 = vmatpush1.msra.mxu0 %v287
  %317 = vmatprep.subr.mxu0 0.0
  %318 = vmatpush1.msra.mxu0 %v286
  %319 = vmatprep.subr.mxu0 0.0
  %320 = vmatpush1.msra.mxu0 %v285
  %321 = vmatprep.subr.mxu0 0.0
  %322 = vmatpush1.msra.mxu0 %v284
  %323 = vmatprep.subr.mxu0 0.0
  %324 = vmatpush1.msra.mxu0 %v283
  %325 = vmatprep.subr.mxu0 0.0
  %326 = vmatpush1.msra.mxu0 %v282
  %327 = vmatprep.subr.mxu0 0.0
  %328 = vmatpush1.msra.mxu0 %v281
  %329 = vmatprep.subr.mxu0 0.0
  %330 = vmatpush2.msra.mxu0 0.0
  %331 = vmatprep.subr.mxu0 0.0
  %332 = vmatpush2.msra.mxu0 0.0
  %333 = vmatprep.subr.mxu0 0.0
  %334 = vmatpush2.msra.mxu0 0.0
  %335 = vmatprep.subr.mxu0 0.0
  %336 = vmatpush2.msra.mxu0 0.0
  %337 = vmatprep.subr.mxu0 0.0
  %338 = vmatpush2.msra.mxu0 0.0
  %339 = vmatprep.subr.mxu0 0.0
  %340 = vmatpush2.msra.mxu0 0.0
  %341 = vmatprep.subr.mxu0 0.0
  %342 = vmatpush2.msra.mxu0 0.0
  %343 = vmatprep.subr.mxu0 0.0
  %344 = vmatpush2.msra.mxu0 0.0
  %345 = vmatprep.subr.mxu0 0.0
  %346 = vmatpush2.msra.mxu0 0.0
  %347 = vmatprep.subr.mxu0 0.0
  %348 = vmatpush2.msra.mxu0 0.0
  %349 = vmatprep.subr.mxu0 0.0
  %350 = vmatpush2.msra.mxu0 0.0
  %351 = vmatprep.subr.mxu0 0.0
  %352 = vmatpush2.msra.mxu0 0.0
  %353 = vmatprep.subr.mxu0 0.0
  %354 = vmatpush2.msra.mxu0 0.0
  %355 = vmatprep.subr.mxu0 0.0
  %356 = vmatpush2.msra.mxu0 0.0
  %357 = vmatprep.subr.mxu0 0.0
  %358 = vmatpush2.msra.mxu0 0.0
  %359 = vmatprep.subr.mxu0 0.0
  %360 = vmatpush2.msra.mxu0 0.0
  %361 = vmatprep.mubr.f32.mxu0 0.0
  %362 = vmatmul.mubr.f32.gmra.mxu0 %v280
  %v363 = vpop.f32.mrf.mxu0
  %v364 = vadd.f32 0.0, %v363
  %v365 = vpop.f32.mrf.mxu0
  %366 = vdwg.mxu0
  %v367 = vmul.f32 %v364, 0.001953125
  %v368 = vmul.f32 %v367, %v367
  %v370 = vrot.slane %v368, 7
  %v372 = vsub.f32 %v367, %v370
  %v373 = vmax.f32 %v372, 0.0
  %v374 = vlaneseq
  %v375 = vshrl.u32 %v374, 7
  %v376 = vsub.s32 0, %v375
  %v377 = vrot.slane %v367, %v376
  %v378 = vsub.f32 %v253, %v377
  %v379 = vsub.f32 %v254, %v377
  %v380 = vsub.f32 %v255, %v377
  %v381 = vsub.f32 %v256, %v377
  %v382 = vadd.f32 %v373, 1e-05
  %v383 = vrsqrt.pop %v382
  %v384 = vlaneseq
  %v385 = vshrl.u32 %v384, 7
  %v386 = vsub.s32 1, %v385
  %v387 = vrot.slane %v383, %v386
  %v388 = vmul.f32 %v378, %v387
  %v389 = vmul.f32 %v379, %v387
  %v390 = vmul.f32 %v380, %v387
  %v391 = vmul.f32 %v381, %v387
  %v392 = vld [vmem:[%s3] sm:$0x1]
  %v394 = vlaneseq
  %v395 = vshrl.u32 %v394, 7
  %v396 = vsub.s32 0, %v395
  %v397 = vrot.slane %v392, %v396
  %v399 = vmul.f32 %v388, %v397
  %v400 = vmul.f32 %v389, %v397
  %v401 = vmul.f32 %v390, %v397
  %v402 = vmul.f32 %v391, %v397
  %v403 = vld [vmem:[%s4] sm:$0x1]
  %v405 = vlaneseq
  %v406 = vshrl.u32 %v405, 7
  %v407 = vsub.s32 0, %v406
  %v408 = vrot.slane %v403, %v407
  %v410 = vadd.f32 %v399, %v408
  %v411 = vadd.f32 %v400, %v408
  %v412 = vadd.f32 %v401, %v408
  %v413 = vadd.f32 %v402, %v408
  %414 = vst [vmem:[#allocation3] sm:$0x1] 0.0
  %415 = vst [vmem:[#allocation3 + $0x18] sm:$0x1] 0.0
  %416 = vst [vmem:[#allocation3 + $0x11] sm:$0x1] 0.0
  %417 = vst [vmem:[#allocation3 + $0x29] sm:$0x1] 0.0
  %418 = vst [vmem:[#allocation3 + $0x1] sm:$0xff] %v410
  %419 = vst [vmem:[#allocation3 + $0x9] sm:$0xff] %v411
  %420 = vst [vmem:[#allocation3 + $0x19] sm:$0xff] %v412
  %421 = vst [vmem:[#allocation3 + $0x21] sm:$0xff] %v413
  %v422 = vld [vmem:[#allocation3] sm:$0xff]
  %v423 = vld [vmem:[#allocation3 + $0x8] sm:$0xff]
  %v424 = vld [vmem:[#allocation3 + $0x18] sm:$0xff]
  %v425 = vld [vmem:[#allocation3 + $0x20] sm:$0xff]
  %v426 = vld [vmem:[#allocation3 + $0x1] sm:$0xff]
  %v427 = vld [vmem:[#allocation3 + $0x9] sm:$0xff]
  %v428 = vld [vmem:[#allocation3 + $0x19] sm:$0xff]
  %v429 = vld [vmem:[#allocation3 + $0x21] sm:$0xff]
  %v430 = vld [vmem:[#allocation3 + $0x2] sm:$0xff]
  %v431 = vld [vmem:[#allocation3 + $0xa] sm:$0xff]
  %v432 = vld [vmem:[#allocation3 + $0x1a] sm:$0xff]
  %v433 = vld [vmem:[#allocation3 + $0x22] sm:$0xff]
  %v434 = vpack.c.bf16 %v423, %v422
  %v435 = vpack.c.bf16 %v427, %v426
  %v436 = vpack.c.bf16 %v431, %v430
  %v437 = vpack.c.bf16 %v425, %v424
  %v438 = vpack.c.bf16 %v429, %v428
  %v439 = vpack.c.bf16 %v433, %v432
  %v440 = vld [vmem:[%s5] sm:$0xf]
  %v441 = vld [vmem:[%s5 + $0x4] sm:$0xf]
  %v442 = vld [vmem:[%s5 + $0x8] sm:$0xf]
  %v443 = vld [vmem:[%s5 + $0xc] sm:$0xf]
  %v444 = vld [vmem:[%s5 + $0x10] sm:$0xf]
  %v445 = vld [vmem:[%s5 + $0x14] sm:$0xf]
  %v446 = vld [vmem:[%s5 + $0x18] sm:$0xf]
  %v447 = vld [vmem:[%s5 + $0x1c] sm:$0xf]
  %v448 = vld [vmem:[%s5 + $0x20] sm:$0xf]
  %v449 = vld [vmem:[%s5 + $0x24] sm:$0xf]
  %v450 = vld [vmem:[%s5 + $0x28] sm:$0xf]
  %v451 = vld [vmem:[%s5 + $0x2c] sm:$0xf]
  %v452 = vld [vmem:[%s5 + $0x30] sm:$0xf]
  %v453 = vld [vmem:[%s5 + $0x34] sm:$0xf]
  %v454 = vld [vmem:[%s5 + $0x38] sm:$0xf]
  %v455 = vld [vmem:[%s5 + $0x3c] sm:$0xf]
  %v456 = vld [vmem:[%s5 + $0x40] sm:$0xf]
  %v457 = vld [vmem:[%s5 + $0x44] sm:$0xf]
  %v458 = vld [vmem:[%s5 + $0x48] sm:$0xf]
  %v459 = vld [vmem:[%s5 + $0x4c] sm:$0xf]
  %v460 = vld [vmem:[%s5 + $0x50] sm:$0xf]
  %v461 = vld [vmem:[%s5 + $0x54] sm:$0xf]
  %v462 = vld [vmem:[%s5 + $0x58] sm:$0xf]
  %v463 = vld [vmem:[%s5 + $0x5c] sm:$0xf]
  %v464 = vld [vmem:[%s5 + $0x60] sm:$0xf]
  %v465 = vld [vmem:[%s5 + $0x64] sm:$0xf]
  %v466 = vld [vmem:[%s5 + $0x68] sm:$0xf]
  %v467 = vld [vmem:[%s5 + $0x6c] sm:$0xf]
  %v468 = vld [vmem:[%s5 + $0x70] sm:$0xf]
  %v469 = vld [vmem:[%s5 + $0x74] sm:$0xf]
  %v470 = vld [vmem:[%s5 + $0x78] sm:$0xf]
  %v471 = vld [vmem:[%s5 + $0x7c] sm:$0xf]
  %v472 = vld [vmem:[%s5 + $0x80] sm:$0xf]
  %v473 = vld [vmem:[%s5 + $0x84] sm:$0xf]
  %v474 = vld [vmem:[%s5 + $0x88] sm:$0xf]
  %v475 = vld [vmem:[%s5 + $0x8c] sm:$0xf]
  %v476 = vld [vmem:[%s5 + $0x90] sm:$0xf]
  %v477 = vld [vmem:[%s5 + $0x94] sm:$0xf]
  %v478 = vld [vmem:[%s5 + $0x98] sm:$0xf]
  %v479 = vld [vmem:[%s5 + $0x9c] sm:$0xf]
  %v480 = vld [vmem:[%s5 + $0xa0] sm:$0xf]
  %v481 = vld [vmem:[%s5 + $0xa4] sm:$0xf]
  %v482 = vld [vmem:[%s5 + $0xa8] sm:$0xf]
  %v483 = vld [vmem:[%s5 + $0xac] sm:$0xf]
  %v484 = vld [vmem:[%s5 + $0xb0] sm:$0xf]
  %v485 = vld [vmem:[%s5 + $0xb4] sm:$0xf]
  %v486 = vld [vmem:[%s5 + $0xb8] sm:$0xf]
  %v487 = vld [vmem:[%s5 + $0xbc] sm:$0xf]
  %v488 = vld [vmem:[%s6] sm:$0x1]
  %v490 = vlaneseq
  %v491 = vshrl.u32 %v490, 7
  %v492 = vsub.s32 0, %v491
  %v493 = vrot.slane %v488, %v492
  %v543 = vunpack.c.l.b16 %v440
  %v544 = vunpack.c.l.b16 %v441
  %v545 = vunpack.c.l.b16 %v442
  %v546 = vunpack.c.l.b16 %v443
  %v547 = vunpack.c.l.b16 %v444
  %v548 = vunpack.c.l.b16 %v445
  %v549 = vunpack.c.l.b16 %v446
  %v550 = vunpack.c.l.b16 %v447
  %v551 = vunpack.c.l.b16 %v448
  %v552 = vunpack.c.l.b16 %v449
  %v553 = vunpack.c.l.b16 %v450
  %v554 = vunpack.c.l.b16 %v451
  %v555 = vunpack.c.l.b16 %v452
  %v556 = vunpack.c.l.b16 %v453
  %v557 = vunpack.c.l.b16 %v454
  %v558 = vunpack.c.l.b16 %v455
  %v559 = vunpack.c.l.b16 %v456
  %v560 = vunpack.c.l.b16 %v457
  %v561 = vunpack.c.l.b16 %v458
  %v562 = vunpack.c.l.b16 %v459
  %v563 = vunpack.c.l.b16 %v460
  %v564 = vunpack.c.l.b16 %v461
  %v565 = vunpack.c.l.b16 %v462
  %v566 = vunpack.c.l.b16 %v463
  %v567 = vunpack.c.l.b16 %v464
  %v568 = vunpack.c.l.b16 %v465
  %v569 = vunpack.c.l.b16 %v466
  %v570 = vunpack.c.l.b16 %v467
  %v571 = vunpack.c.l.b16 %v468
  %v572 = vunpack.c.l.b16 %v469
  %v573 = vunpack.c.l.b16 %v470
  %v574 = vunpack.c.l.b16 %v471
  %v575 = vunpack.c.l.b16 %v472
  %v576 = vunpack.c.l.b16 %v473
  %v577 = vunpack.c.l.b16 %v474
  %v578 = vunpack.c.l.b16 %v475
  %v579 = vunpack.c.l.b16 %v476
  %v580 = vunpack.c.l.b16 %v477
  %v581 = vunpack.c.l.b16 %v478
  %v582 = vunpack.c.l.b16 %v479
  %v583 = vunpack.c.l.b16 %v480
  %v584 = vunpack.c.l.b16 %v481
  %v585 = vunpack.c.l.b16 %v482
  %v586 = vunpack.c.l.b16 %v483
  %v587 = vunpack.c.l.b16 %v484
  %v588 = vunpack.c.l.b16 %v485
  %v589 = vunpack.c.l.b16 %v486
  %v590 = vunpack.c.l.b16 %v487
  %v591 = vpack.c.b16 %v544, %v543
  %v592 = vpack.c.b16 %v546, %v545
  %v593 = vpack.c.b16 %v548, %v547
  %v594 = vpack.c.b16 %v550, %v549
  %v595 = vpack.c.b16 %v552, %v551
  %v596 = vpack.c.b16 %v554, %v553
  %v597 = vpack.c.b16 %v556, %v555
  %v598 = vpack.c.b16 %v558, %v557
  %v599 = vpack.c.b16 %v560, %v559
  %v600 = vpack.c.b16 %v562, %v561
  %v601 = vpack.c.b16 %v564, %v563
  %v602 = vpack.c.b16 %v566, %v565
  %v603 = vpack.c.b16 %v568, %v567
  %v604 = vpack.c.b16 %v570, %v569
  %v605 = vpack.c.b16 %v572, %v571
  %v606 = vpack.c.b16 %v574, %v573
  %v607 = vpack.c.b16 %v576, %v575
  %v608 = vpack.c.b16 %v578, %v577
  %v609 = vpack.c.b16 %v580, %v579
  %v610 = vpack.c.b16 %v582, %v581
  %v611 = vpack.c.b16 %v584, %v583
  %v612 = vpack.c.b16 %v586, %v585
  %v613 = vpack.c.b16 %v588, %v587
  %v614 = vpack.c.b16 %v590, %v589
  %639 = vmatprep.subr.bf16.mxu0 0
  %640 = vmatpush1.bf16.msra.mxu0 %v598
  %641 = vmatprep.subr.bf16.mxu0 0
  %642 = vmatpush1.bf16.msra.mxu0 %v597
  %643 = vmatprep.subr.bf16.mxu0 0
  %644 = vmatpush1.bf16.msra.mxu0 %v596
  %645 = vmatprep.subr.bf16.mxu0 0
  %646 = vmatpush1.bf16.msra.mxu0 %v595
  %647 = vmatprep.subr.bf16.mxu0 0
  %648 = vmatpush1.bf16.msra.mxu0 %v594
  %649 = vmatprep.subr.bf16.mxu0 0
  %650 = vmatpush1.bf16.msra.mxu0 %v593
  %651 = vmatprep.subr.bf16.mxu0 0
  %652 = vmatpush1.bf16.msra.mxu0 %v592
  %653 = vmatprep.subr.bf16.mxu0 0
  %654 = vmatpush1.bf16.msra.mxu0 %v591
  %655 = vmatprep.subr.bf16.mxu0 0
  %656 = vmatpush2.bf16.msra.mxu0 %v606
  %657 = vmatprep.subr.bf16.mxu0 0
  %658 = vmatpush2.bf16.msra.mxu0 %v605
  %659 = vmatprep.subr.bf16.mxu0 0
  %660 = vmatpush2.bf16.msra.mxu0 %v604
  %661 = vmatprep.subr.bf16.mxu0 0
  %662 = vmatpush2.bf16.msra.mxu0 %v603
  %663 = vmatprep.subr.bf16.mxu0 0
  %664 = vmatpush2.bf16.msra.mxu0 %v602
  %665 = vmatprep.subr.bf16.mxu0 0
  %666 = vmatpush2.bf16.msra.mxu0 %v601
  %667 = vmatprep.subr.bf16.mxu0 0
  %668 = vmatpush2.bf16.msra.mxu0 %v600
  %669 = vmatprep.subr.bf16.mxu0 0
  %670 = vmatpush2.bf16.msra.mxu0 %v599
  %671 = vmatprep.mubr.bf16.mxu0 %v435
  %672 = vmatmul.mubr.bf16.gmra.mxu0 %v434
  %v673 = vpop.f32.mrf.mxu0
  %v674 = vadd.f32 %v493, %v673
  %v675 = vpop.f32.mrf.mxu0
  %v676 = vpop.f32.mrf.mxu0
  %v677 = vadd.f32 %v493, %v676
  %v678 = vpop.f32.mrf.mxu0
  %679 = vmatprep.mubr.bf16.mxu0 %v438
  %680 = vmatmul.mubr.bf16.gmra.mxu0 %v437
  %v681 = vpop.f32.mrf.mxu0
  %v682 = vadd.f32 %v493, %v681
  %v683 = vpop.f32.mrf.mxu0
  %v684 = vpop.f32.mrf.mxu0
  %v685 = vadd.f32 %v493, %v684
  %v686 = vpop.f32.mrf.mxu0
  %687 = vdwg.mxu0
  %688 = vmatprep.subr.bf16.mxu0 0
  %689 = vmatpush1.bf16.msra.mxu0 %v614
  %690 = vmatprep.subr.bf16.mxu0 0
  %691 = vmatpush1.bf16.msra.mxu0 %v613
  %692 = vmatprep.subr.bf16.mxu0 0
  %693 = vmatpush1.bf16.msra.mxu0 %v612
  %694 = vmatprep.subr.bf16.mxu0 0
  %695 = vmatpush1.bf16.msra.mxu0 %v611
  %696 = vmatprep.subr.bf16.mxu0 0
  %697 = vmatpush1.bf16.msra.mxu0 %v610
  %698 = vmatprep.subr.bf16.mxu0 0
  %699 = vmatpush1.bf16.msra.mxu0 %v609
  %700 = vmatprep.subr.bf16.mxu0 0
  %701 = vmatpush1.bf16.msra.mxu0 %v608
  %702 = vmatprep.subr.bf16.mxu0 0
  %703 = vmatpush1.bf16.msra.mxu0 %v607
  %704 = vmatprep.subr.bf16.mxu0 0
  %705 = vmatpush2.bf16.msra.mxu0 0
  %706 = vmatprep.subr.bf16.mxu0 0
  %707 = vmatpush2.bf16.msra.mxu0 0
  %708 = vmatprep.subr.bf16.mxu0 0
  %709 = vmatpush2.bf16.msra.mxu0 0
  %710 = vmatprep.subr.bf16.mxu0 0
  %711 = vmatpush2.bf16.msra.mxu0 0
  %712 = vmatprep.subr.bf16.mxu0 0
  %713 = vmatpush2.bf16.msra.mxu0 0
  %714 = vmatprep.subr.bf16.mxu0 0
  %715 = vmatpush2.bf16.msra.mxu0 0
  %716 = vmatprep.subr.bf16.mxu0 0
  %717 = vmatpush2.bf16.msra.mxu0 0
  %718 = vmatprep.subr.bf16.mxu0 0
  %719 = vmatpush2.bf16.msra.mxu0 0
  %720 = vmatprep.mubr.bf16.mxu0 0
  %721 = vmatmul.mubr.bf16.gmra.mxu0 %v436
  %v722 = vpop.f32.mrf.mxu0
  %v723 = vadd.f32 %v674, %v722
  %v724 = vpop.f32.mrf.mxu0
  %v725 = vpop.f32.mrf.mxu0
  %v726 = vadd.f32 %v677, %v725
  %v727 = vpop.f32.mrf.mxu0
  %728 = vmatprep.mubr.bf16.mxu0 0
  %729 = vmatmul.mubr.bf16.gmra.mxu0 %v439
  %v730 = vpop.f32.mrf.mxu0
  %v731 = vadd.f32 %v682, %v730
  %v732 = vpop.f32.mrf.mxu0
  %v733 = vpop.f32.mrf.mxu0
  %v734 = vadd.f32 %v685, %v733
  %v735 = vpop.f32.mrf.mxu0
  %736 = vdwg.mxu0
  %v737 = vmul.f32 %v723, 0.01
  %v738 = vmul.f32 %v726, 0.01
  %v739 = vmul.f32 %v731, 0.01
  %v740 = vmul.f32 %v734, 0.01
  %v741 = vmax.f32 %v723, %v737
  %v742 = vmax.f32 %v726, %v738
  %v743 = vmax.f32 %v731, %v739
  %v744 = vmax.f32 %v734, %v740
  %v745 = vadd.f32 %v741, %v742
  %v746 = vadd.f32 %v745, %v743
  %v747 = vadd.f32 %v746, %v744
  %v748 = vrot.slane %v747, 4
  %v749 = vadd.f32 %v747, %v748
  %v750 = vrot.slane %v749, 2
  %v751 = vadd.f32 %v749, %v750
  %v752 = vrot.slane %v751, 1
  %v753 = vadd.f32 %v751, %v752
  %v754 = vmul.f32 %v741, %v741
  %v755 = vmul.f32 %v742, %v742
  %v756 = vmul.f32 %v743, %v743
  %v757 = vmul.f32 %v744, %v744
  %v758 = vadd.f32 %v754, %v755
  %v759 = vadd.f32 %v758, %v756
  %v760 = vadd.f32 %v759, %v757
  %v761 = vrot.slane %v760, 4
  %v762 = vadd.f32 %v760, %v761
  %v763 = vrot.slane %v762, 2
  %v764 = vadd.f32 %v762, %v763
  %v765 = vrot.slane %v764, 1
  %v766 = vadd.f32 %v764, %v765
  %v767 = vsel %vm279, %v753, %v766
  %v768 = vld [vmem:[%s9] sm:$0xff]
  %v769 = vld [vmem:[%s9 + $0x8] sm:$0xff]
  %v770 = vld [vmem:[%s9 + $0x10] sm:$0xff]
  %v771 = vld [vmem:[%s9 + $0x18] sm:$0xff]
  %v772 = vld [vmem:[%s9 + $0x20] sm:$0xff]
  %v773 = vld [vmem:[%s9 + $0x28] sm:$0xff]
  %v774 = vld [vmem:[%s9 + $0x30] sm:$0xff]
  %v775 = vld [vmem:[%s9 + $0x38] sm:$0xff]
  %v776 = vld [vmem:[%s9 + $0x40] sm:$0xff]
  %v777 = vld [vmem:[%s9 + $0x48] sm:$0xff]
  %v778 = vld [vmem:[%s9 + $0x50] sm:$0xff]
  %v779 = vld [vmem:[%s9 + $0x58] sm:$0xff]
  %v780 = vld [vmem:[%s9 + $0x60] sm:$0xff]
  %v781 = vld [vmem:[%s9 + $0x68] sm:$0xff]
  %v782 = vld [vmem:[%s9 + $0x70] sm:$0xff]
  %v783 = vld [vmem:[%s9 + $0x78] sm:$0xff]
  %784 = vmatprep.subr.mxu0 0.0
  %785 = vmatpush1.msra.mxu0 %v783
  %786 = vmatprep.subr.mxu0 0.0
  %787 = vmatpush1.msra.mxu0 %v782
  %788 = vmatprep.subr.mxu0 0.0
  %789 = vmatpush1.msra.mxu0 %v781
  %790 = vmatprep.subr.mxu0 0.0
  %791 = vmatpush1.msra.mxu0 %v780
  %792 = vmatprep.subr.mxu0 0.0
  %793 = vmatpush1.msra.mxu0 %v779
  %794 = vmatprep.subr.mxu0 0.0
  %795 = vmatpush1.msra.mxu0 %v778
  %796 = vmatprep.subr.mxu0 0.0
  %797 = vmatpush1.msra.mxu0 %v777
  %798 = vmatprep.subr.mxu0 0.0
  %799 = vmatpush1.msra.mxu0 %v776
  %800 = vmatprep.subr.mxu0 0.0
  %801 = vmatpush1.msra.mxu0 %v775
  %802 = vmatprep.subr.mxu0 0.0
  %803 = vmatpush1.msra.mxu0 %v774
  %804 = vmatprep.subr.mxu0 0.0
  %805 = vmatpush1.msra.mxu0 %v773
  %806 = vmatprep.subr.mxu0 0.0
  %807 = vmatpush1.msra.mxu0 %v772
  %808 = vmatprep.subr.mxu0 0.0
  %809 = vmatpush1.msra.mxu0 %v771
  %810 = vmatprep.subr.mxu0 0.0
  %811 = vmatpush1.msra.mxu0 %v770
  %812 = vmatprep.subr.mxu0 0.0
  %813 = vmatpush1.msra.mxu0 %v769
  %814 = vmatprep.subr.mxu0 0.0
  %815 = vmatpush1.msra.mxu0 %v768
  %816 = vmatprep.subr.mxu0 0.0
  %817 = vmatpush2.msra.mxu0 0.0
  %818 = vmatprep.subr.mxu0 0.0
  %819 = vmatpush2.msra.mxu0 0.0
  %820 = vmatprep.subr.mxu0 0.0
  %821 = vmatpush2.msra.mxu0 0.0
  %822 = vmatprep.subr.mxu0 0.0
  %823 = vmatpush2.msra.mxu0 0.0
  %824 = vmatprep.subr.mxu0 0.0
  %825 = vmatpush2.msra.mxu0 0.0
  %826 = vmatprep.subr.mxu0 0.0
  %827 = vmatpush2.msra.mxu0 0.0
  %828 = vmatprep.subr.mxu0 0.0
  %829 = vmatpush2.msra.mxu0 0.0
  %830 = vmatprep.subr.mxu0 0.0
  %831 = vmatpush2.msra.mxu0 0.0
  %832 = vmatprep.subr.mxu0 0.0
  %833 = vmatpush2.msra.mxu0 0.0
  %834 = vmatprep.subr.mxu0 0.0
  %835 = vmatpush2.msra.mxu0 0.0
  %836 = vmatprep.subr.mxu0 0.0
  %837 = vmatpush2.msra.mxu0 0.0
  %838 = vmatprep.subr.mxu0 0.0
  %839 = vmatpush2.msra.mxu0 0.0
  %840 = vmatprep.subr.mxu0 0.0
  %841 = vmatpush2.msra.mxu0 0.0
  %842 = vmatprep.subr.mxu0 0.0
  %843 = vmatpush2.msra.mxu0 0.0
  %844 = vmatprep.subr.mxu0 0.0
  %845 = vmatpush2.msra.mxu0 0.0
  %846 = vmatprep.subr.mxu0 0.0
  %847 = vmatpush2.msra.mxu0 0.0
  %848 = vmatprep.mubr.f32.mxu0 0.0
  %849 = vmatmul.mubr.f32.gmra.mxu0 %v767
  %v850 = vpop.f32.mrf.mxu0
  %v851 = vadd.f32 0.0, %v850
  %v852 = vpop.f32.mrf.mxu0
  %853 = vdwg.mxu0
  %v854 = vmul.f32 %v851, 0.001953125
  %v855 = vmul.f32 %v854, %v854
  %v857 = vrot.slane %v855, 7
  %v859 = vsub.f32 %v854, %v857
  %v860 = vmax.f32 %v859, 0.0
  %v861 = vlaneseq
  %v862 = vshrl.u32 %v861, 7
  %v863 = vsub.s32 0, %v862
  %v864 = vrot.slane %v854, %v863
  %v865 = vsub.f32 %v741, %v864
  %v866 = vsub.f32 %v742, %v864
  %v867 = vsub.f32 %v743, %v864
  %v868 = vsub.f32 %v744, %v864
  %v869 = vadd.f32 %v860, 1e-05
  %v870 = vrsqrt.pop %v869
  %v871 = vlaneseq
  %v872 = vshrl.u32 %v871, 7
  %v873 = vsub.s32 1, %v872
  %v874 = vrot.slane %v870, %v873
  %v875 = vmul.f32 %v865, %v874
  %v876 = vmul.f32 %v866, %v874
  %v877 = vmul.f32 %v867, %v874
  %v878 = vmul.f32 %v868, %v874
  %v879 = vld [vmem:[%s7] sm:$0x1]
  %v881 = vlaneseq
  %v882 = vshrl.u32 %v881, 7
  %v883 = vsub.s32 0, %v882
  %v884 = vrot.slane %v879, %v883
  %v886 = vmul.f32 %v875, %v884
  %v887 = vmul.f32 %v876, %v884
  %v888 = vmul.f32 %v877, %v884
  %v889 = vmul.f32 %v878, %v884
  %v890 = vld [vmem:[%s8] sm:$0x1]
  %v892 = vlaneseq
  %v893 = vshrl.u32 %v892, 7
  %v894 = vsub.s32 0, %v893
  %v895 = vrot.slane %v890, %v894
  %v897 = vadd.f32 %v886, %v895
  %v898 = vadd.f32 %v887, %v895
  %v899 = vadd.f32 %v888, %v895
  %v900 = vadd.f32 %v889, %v895
  %901 = vst [vmem:[%s12] sm:$0xff] %v897
  %902 = vst [vmem:[%s12 + $0x8] sm:$0xff] %v898
  %903 = vst [vmem:[%s12 + $0x10] sm:$0xff] %v899
  %904 = vst [vmem:[%s12 + $0x18] sm:$0xff] %v900
  %v906 = vunpack.c.l.s4 1966171168
  %v907 = vunpack.c.0.s8 %v906
  %v908 = vlaneseq
  %v909 = vshrl.u32 %v908, 7
  %v910 = vsub.s32 %v907, %v909
  %v911 = vrot.slane %v897, %v910
  %v913 = vunpack.c.l.s4 1966171168
  %v914 = vunpack.c.0.s8 %v913
  %v915 = vlaneseq
  %v916 = vshrl.u32 %v915, 7
  %v917 = vsub.s32 %v914, %v916
  %v918 = vrot.slane %v898, %v917
  %v920 = vunpack.c.l.s4 1966171168
  %v921 = vunpack.c.0.s8 %v920
  %v922 = vlaneseq
  %v923 = vshrl.u32 %v922, 7
  %v924 = vsub.s32 %v921, %v923
  %v925 = vrot.slane %v899, %v924
  %v927 = vunpack.c.l.s4 1966171168
  %v928 = vunpack.c.0.s8 %v927
  %v929 = vlaneseq
  %v930 = vshrl.u32 %v929, 7
  %v931 = vsub.s32 %v928, %v930
  %v932 = vrot.slane %v900, %v931
  %v937 = vrot.slane %v911, 4
  %v938 = vrot.slane %v918, 4
  %v939 = vrot.slane %v925, 4
  %v940 = vrot.slane %v932, 4
  %v945 = vmax.f32 %v911, %v937
  %v946 = vmax.f32 %v918, %v938
  %v947 = vmax.f32 %v925, %v939
  %v948 = vmax.f32 %v932, %v940
  %v953 = vcombine.low %v945, %v946
  %v954 = vcombine.low %v947, %v948
  %v958 = vunpack.c.l.s4 1966171168
  %v959 = vunpack.c.0.s8 %v958
  %v960 = vlaneseq
  %v961 = vshrl.u32 %v960, 7
  %v962 = vsub.s32 %v959, %v961
  %v963 = vrot.slane %v953, %v962
  %v965 = vunpack.c.l.s4 1966171168
  %v966 = vunpack.c.0.s8 %v965
  %v967 = vlaneseq
  %v968 = vshrl.u32 %v967, 7
  %v969 = vsub.s32 %v966, %v968
  %v970 = vrot.slane %v954, %v969
  %v973 = vcombine.low %v963, %v970
  %v974 = vcombine.high %v963, %v970
  %v977 = vpack.c.bf16 %v973, %v973
  %v978 = vpack.c.bf16 %v974, %v974
  %v979 = vld [vmem:[%s10] sm:$0xff]
  %v980 = vld [vmem:[%s10 + $0x8] sm:$0xff]
  %v981 = vld [vmem:[%s10 + $0x10] sm:$0xff]
  %v982 = vld [vmem:[%s10 + $0x18] sm:$0xff]
  %v983 = vld [vmem:[%s10 + $0x20] sm:$0xff]
  %v984 = vld [vmem:[%s10 + $0x28] sm:$0xff]
  %v985 = vld [vmem:[%s10 + $0x30] sm:$0xff]
  %v986 = vld [vmem:[%s10 + $0x38] sm:$0xff]
  %v987 = vld [vmem:[%s10 + $0x40] sm:$0xff]
  %v988 = vld [vmem:[%s10 + $0x48] sm:$0xff]
  %v989 = vld [vmem:[%s10 + $0x50] sm:$0xff]
  %v990 = vld [vmem:[%s10 + $0x58] sm:$0xff]
  %v991 = vld [vmem:[%s10 + $0x60] sm:$0xff]
  %v992 = vld [vmem:[%s10 + $0x68] sm:$0xff]
  %v993 = vld [vmem:[%s10 + $0x70] sm:$0xff]
  %v994 = vld [vmem:[%s10 + $0x78] sm:$0xff]
  %v995 = vld [vmem:[%s10 + $0x80] sm:$0xff]
  %v996 = vld [vmem:[%s10 + $0x88] sm:$0xff]
  %v997 = vld [vmem:[%s10 + $0x90] sm:$0xff]
  %v998 = vld [vmem:[%s10 + $0x98] sm:$0xff]
  %v999 = vld [vmem:[%s10 + $0xa0] sm:$0xff]
  %v1000 = vld [vmem:[%s10 + $0xa8] sm:$0xff]
  %v1001 = vld [vmem:[%s10 + $0xb0] sm:$0xff]
  %v1002 = vld [vmem:[%s10 + $0xb8] sm:$0xff]
  %v1003 = vld [vmem:[%s10 + $0xc0] sm:$0xff]
  %v1004 = vld [vmem:[%s10 + $0xc8] sm:$0xff]
  %v1005 = vld [vmem:[%s10 + $0xd0] sm:$0xff]
  %v1006 = vld [vmem:[%s10 + $0xd8] sm:$0xff]
  %v1007 = vld [vmem:[%s10 + $0xe0] sm:$0xff]
  %v1008 = vld [vmem:[%s10 + $0xe8] sm:$0xff]
  %v1009 = vld [vmem:[%s10 + $0xf0] sm:$0xff]
  %v1010 = vld [vmem:[%s10 + $0xf8] sm:$0xff]
  %v1043 = vunpack.c.l.b16 %v979
  %v1044 = vunpack.c.h.b16 %v979
  %v1045 = vunpack.c.l.b16 %v980
  %v1046 = vunpack.c.h.b16 %v980
  %v1047 = vunpack.c.l.b16 %v981
  %v1048 = vunpack.c.h.b16 %v981
  %v1049 = vunpack.c.l.b16 %v982
  %v1050 = vunpack.c.h.b16 %v982
  %v1051 = vunpack.c.l.b16 %v983
  %v1052 = vunpack.c.h.b16 %v983
  %v1053 = vunpack.c.l.b16 %v984
  %v1054 = vunpack.c.h.b16 %v984
  %v1055 = vunpack.c.l.b16 %v985
  %v1056 = vunpack.c.h.b16 %v985
  %v1057 = vunpack.c.l.b16 %v986
  %v1058 = vunpack.c.h.b16 %v986
  %v1059 = vunpack.c.l.b16 %v987
  %v1060 = vunpack.c.h.b16 %v987
  %v1061 = vunpack.c.l.b16 %v988
  %v1062 = vunpack.c.h.b16 %v988
  %v1063 = vunpack.c.l.b16 %v989
  %v1064 = vunpack.c.h.b16 %v989
  %v1065 = vunpack.c.l.b16 %v990
  %v1066 = vunpack.c.h.b16 %v990
  %v1067 = vunpack.c.l.b16 %v991
  %v1068 = vunpack.c.h.b16 %v991
  %v1069 = vunpack.c.l.b16 %v992
  %v1070 = vunpack.c.h.b16 %v992
  %v1071 = vunpack.c.l.b16 %v993
  %v1072 = vunpack.c.h.b16 %v993
  %v1073 = vunpack.c.l.b16 %v994
  %v1074 = vunpack.c.h.b16 %v994
  %v1075 = vunpack.c.l.b16 %v995
  %v1076 = vunpack.c.h.b16 %v995
  %v1077 = vunpack.c.l.b16 %v996
  %v1078 = vunpack.c.h.b16 %v996
  %v1079 = vunpack.c.l.b16 %v997
  %v1080 = vunpack.c.h.b16 %v997
  %v1081 = vunpack.c.l.b16 %v998
  %v1082 = vunpack.c.h.b16 %v998
  %v1083 = vunpack.c.l.b16 %v999
  %v1084 = vunpack.c.h.b16 %v999
  %v1085 = vunpack.c.l.b16 %v1000
  %v1086 = vunpack.c.h.b16 %v1000
  %v1087 = vunpack.c.l.b16 %v1001
  %v1088 = vunpack.c.h.b16 %v1001
  %v1089 = vunpack.c.l.b16 %v1002
  %v1090 = vunpack.c.h.b16 %v1002
  %v1091 = vunpack.c.l.b16 %v1003
  %v1092 = vunpack.c.h.b16 %v1003
  %v1093 = vunpack.c.l.b16 %v1004
  %v1094 = vunpack.c.h.b16 %v1004
  %v1095 = vunpack.c.l.b16 %v1005
  %v1096 = vunpack.c.h.b16 %v1005
  %v1097 = vunpack.c.l.b16 %v1006
  %v1098 = vunpack.c.h.b16 %v1006
  %v1099 = vunpack.c.l.b16 %v1007
  %v1100 = vunpack.c.h.b16 %v1007
  %v1101 = vunpack.c.l.b16 %v1008
  %v1102 = vunpack.c.h.b16 %v1008
  %v1103 = vunpack.c.l.b16 %v1009
  %v1104 = vunpack.c.h.b16 %v1009
  %v1105 = vunpack.c.l.b16 %v1010
  %v1106 = vunpack.c.h.b16 %v1010
  %v1107 = vpack.c.b16 %v1045, %v1043
  %v1108 = vpack.c.b16 %v1046, %v1044
  %v1109 = vpack.c.b16 %v1049, %v1047
  %v1110 = vpack.c.b16 %v1050, %v1048
  %v1111 = vpack.c.b16 %v1053, %v1051
  %v1112 = vpack.c.b16 %v1054, %v1052
  %v1113 = vpack.c.b16 %v1057, %v1055
  %v1114 = vpack.c.b16 %v1058, %v1056
  %v1115 = vpack.c.b16 %v1061, %v1059
  %v1116 = vpack.c.b16 %v1062, %v1060
  %v1117 = vpack.c.b16 %v1065, %v1063
  %v1118 = vpack.c.b16 %v1066, %v1064
  %v1119 = vpack.c.b16 %v1069, %v1067
  %v1120 = vpack.c.b16 %v1070, %v1068
  %v1121 = vpack.c.b16 %v1073, %v1071
  %v1122 = vpack.c.b16 %v1074, %v1072
  %v1123 = vpack.c.b16 %v1077, %v1075
  %v1124 = vpack.c.b16 %v1078, %v1076
  %v1125 = vpack.c.b16 %v1081, %v1079
  %v1126 = vpack.c.b16 %v1082, %v1080
  %v1127 = vpack.c.b16 %v1085, %v1083
  %v1128 = vpack.c.b16 %v1086, %v1084
  %v1129 = vpack.c.b16 %v1089, %v1087
  %v1130 = vpack.c.b16 %v1090, %v1088
  %v1131 = vpack.c.b16 %v1093, %v1091
  %v1132 = vpack.c.b16 %v1094, %v1092
  %v1133 = vpack.c.b16 %v1097, %v1095
  %v1134 = vpack.c.b16 %v1098, %v1096
  %v1135 = vpack.c.b16 %v1101, %v1099
  %v1136 = vpack.c.b16 %v1102, %v1100
  %v1137 = vpack.c.b16 %v1105, %v1103
  %v1138 = vpack.c.b16 %v1106, %v1104
  %1171 = vmatprep.subr.bf16.mxu0 %v1122
  %1172 = vmatpush1.bf16.msra.mxu0 %v1121
  %1173 = vmatprep.subr.bf16.mxu0 %v1120
  %1174 = vmatpush1.bf16.msra.mxu0 %v1119
  %1175 = vmatprep.subr.bf16.mxu0 %v1118
  %1176 = vmatpush1.bf16.msra.mxu0 %v1117
  %1177 = vmatprep.subr.bf16.mxu0 %v1116
  %1178 = vmatpush1.bf16.msra.mxu0 %v1115
  %1179 = vmatprep.subr.bf16.mxu0 %v1114
  %1180 = vmatpush1.bf16.msra.mxu0 %v1113
  %1181 = vmatprep.subr.bf16.mxu0 %v1112
  %1182 = vmatpush1.bf16.msra.mxu0 %v1111
  %1183 = vmatprep.subr.bf16.mxu0 %v1110
  %1184 = vmatpush1.bf16.msra.mxu0 %v1109
  %1185 = vmatprep.subr.bf16.mxu0 %v1108
  %1186 = vmatpush1.bf16.msra.mxu0 %v1107
  %1187 = vmatprep.subr.bf16.mxu0 %v1138
  %1188 = vmatpush2.bf16.msra.mxu0 %v1137
  %1189 = vmatprep.subr.bf16.mxu0 %v1136
  %1190 = vmatpush2.bf16.msra.mxu0 %v1135
  %1191 = vmatprep.subr.bf16.mxu0 %v1134
  %1192 = vmatpush2.bf16.msra.mxu0 %v1133
  %1193 = vmatprep.subr.bf16.mxu0 %v1132
  %1194 = vmatpush2.bf16.msra.mxu0 %v1131
  %1195 = vmatprep.subr.bf16.mxu0 %v1130
  %1196 = vmatpush2.bf16.msra.mxu0 %v1129
  %1197 = vmatprep.subr.bf16.mxu0 %v1128
  %1198 = vmatpush2.bf16.msra.mxu0 %v1127
  %1199 = vmatprep.subr.bf16.mxu0 %v1126
  %1200 = vmatpush2.bf16.msra.mxu0 %v1125
  %1201 = vmatprep.subr.bf16.mxu0 %v1124
  %1202 = vmatpush2.bf16.msra.mxu0 %v1123
  %1203 = vmatprep.mubr.bf16.mxu0 %v978
  %1204 = vmatmul.mubr.bf16.gmra.mxu0 %v977
  %v1205 = vpop.f32.mrf.mxu0
  %v1206 = vadd.f32 0.0, %v1205
  %v1207 = vpop.f32.mrf.mxu0
  %v1208 = vadd.f32 0.0, %v1207
  %v1209 = vpop.f32.mrf.mxu0
  %v1210 = vpop.f32.mrf.mxu0
  %1211 = vdwg.mxu0
  %v1212 = vmax.f32 %v1206, %v1208
  %v1214 = vcombine.high %v1212, %v1212
  %1216 = vst [vmem:[%s11] sm:$0xf] %v1212
  %1217 = vst [vmem:[%s11 + $0x4] sm:$0xf] %v1214
  // Predicated region
  $region46: #{down_forward.1} parent=0 // pred_check
    _
  $region47: #{down_forward.1} parent=0 // pred_check_branch
    %1219 = sbr.rel (0) target = $region49
  $region48: #{down_forward.1} parent=0 // pred_region
    _
  $region49: #{down_forward.1} parent=0 // pred_fallthru
    _
  // Predicated region
  $region50: #{down_forward.1} parent=0 // pred_check
    _
  $region51: #{down_forward.1} parent=0 // pred_check_branch
    %1221 = sbr.rel (0) target = $region53
  $region52: #{down_forward.1} parent=0 // pred_region
    _
  $region53: #{down_forward.1} parent=0 // pred_fallthru
    _
  // Predicated region
  $region54: #{down_forward.1} parent=0 // pred_check
    _
  $region55: #{down_forward.1} parent=0 // pred_check_branch
    %1223 = sbr.rel (0) target = $region57
  $region56: #{down_forward.1} parent=0 // pred_region
    _
  $region57: #{down_forward.1} parent=0 // pred_fallthru
    _
  // Predicated region
  $region58: #{down_forward.1} parent=0 // pred_check
    _
  $region59: #{down_forward.1} parent=0 // pred_check_branch
    %1225 = sbr.rel (0) target = $region61
  $region60: #{down_forward.1} parent=0 // pred_region
    _
  $region61: #{down_forward.1} parent=0 // pred_fallthru
    _

</llo_original>
